<compile_context>
chip_gen: v6e
topology: v6e:2x2x1
jax: 0.10.0
libtpu: 0.0.40
codegen_flags: <defaults>
</compile_context>

<pallas_src>
import numpy as np
import jax
import jax.numpy as jnp
from jax.experimental import pallas as pl
from jax.experimental.pallas import tpu as pltpu

LEAKY_SLOPE = 0.01   # F.leaky_relu default negative_slope
BN_EPS = 1e-5        # nn.BatchNorm2d default eps
SIZE = 2 ** 6        # 64, as in the module


# ----------------------------------------------------------------------------
# Trace-time (numpy) helpers: stage-1 row ordering + stage-2 w-validity mask
# ----------------------------------------------------------------------------
def _stage1_row_order(N):
    """Row order for the stage-1 im2col matrix.

    First 64*N rows: the 4 pool taps (a, c) in {(0,0),(0,1),(1,0),(1,1)}, each
    block ordered (oi, oj, n) over the 4x4 pooled grid -> pooling is the max of
    4 contiguous row blocks and the result rows come out in (h, w, n) order.
    Remaining 161*N rows: conv outputs the pool discards (needed for BN stats).
    """
    ns, hs, ws = [], [], []
    for a in range(2):
        for c in range(2):
            for oi in range(4):
                for oj in range(4):
                    for n in range(N):
                        ns.append(n)
                        hs.append(4 * oi + a)
                        ws.append(4 * oj + c)
    for n in range(N):
        for h in range(15):
            for w in range(15):
                if h % 4 < 2 and w % 4 < 2:
                    continue  # already covered by a pool-tap block
                ns.append(n)
                hs.append(h)
                ws.append(w)

    # --- trace-time guards for the wrapper<->kernel row-order coupling -------
    assert len(ns) == 225 * N
    assert len({(n, h, w) for n, h, w in zip(ns, hs, ws)}) == 225 * N
    B1 = 16 * N
    for k, (a, c) in enumerate([(0, 0), (0, 1), (1, 0), (1, 1)]):
        for oi in range(4):
            for oj in range(4):
                r = k * B1 + (oi * 4 + oj) * N          # first sample of the group
                assert (ns[r], hs[r], ws[r]) == (0, 4 * oi + a, 4 * oj + c)
    return np.array(ns), np.array(hs), np.array(ws)


def _stage2_w_mask(N):
    """w-validity mask for the stage-2 taps.

    mask[(h*4+w)*N + n, t] = 1.0 iff 0 <= w + dw < 4, with t = di*3 + dj and
    dw = dj - 1.  h-validity is handled by the 5N-row zero padding applied to
    pool1 inside the kernel, so only w needs masking (and only for dj != 1).
    """
    M = np.zeros((16 * N, 9), np.float32)
    for t in range(9):
        dw = (t % 3) - 1
        for h in range(4):
            for w in range(4):
                if 0 <= w + dw < 4:
                    M[(h * 4 + w) * N:(h * 4 + w + 1) * N, t] = 1.0
    return M


# ----------------------------------------------------------------------------
# Fused Pallas kernel
# ----------------------------------------------------------------------------
def _make_fused_kernel(N):
    M1 = N * 15 * 15          # conv1 output positions (BN stat count)
    B1 = 16 * N               # rows of the pooled stage-1 map ((h, w, n) order)
    M2 = 16 * N               # conv2 output positions
    M3 = 4 * N                # conv3 output positions
    C3 = 4 * SIZE             # 256 conv3 channels

    def bn_scale_shift(col_sum, col_sumsq, m, g, be):
        mean = col_sum * (1.0 / m)
        var = jnp.maximum(col_sumsq * (1.0 / m) - mean * mean, 0.0)
        scale = g * jax.lax.rsqrt(var + BN_EPS)
        shift = be - mean * scale
        return scale, shift

    def leaky(z):
        return jnp.where(z >= 0.0, z, LEAKY_SLOPE * z)

    def kernel(p1_ref, mask2_ref,
               w1_ref, b1_ref, g1_ref, be1_ref,
               w2_ref, b2_ref, g2_ref, be2_ref,
               w3_ref, b3_ref, g3_ref, be3_ref,
               w4_ref, b4_ref, o_ref):
        # ------------- stage 1: Conv2d(1,64,4,pad=1) -> leaky -> BN -> pool ----
        z1 = jnp.dot(p1_ref[...], w1_ref[...], preferred_element_type=jnp.float32)
        z1 = leaky(z1 + b1_ref[...])                               # (225N, 64)
        scale, shift = bn_scale_shift(
            jnp.sum(z1, axis=0, keepdims=True),
            jnp.sum(z1 * z1, axis=0, keepdims=True),
            float(M1), g1_ref[...], be1_ref[...])
        zt = z1[0:4 * B1, :] * scale + shift       # normalize pool-fed rows only
        pool1 = jnp.maximum(jnp.maximum(zt[0:B1], zt[B1:2 * B1]),
                            jnp.maximum(zt[2 * B1:3 * B1], zt[3 * B1:4 * B1]))
        # pool1: (16N, 64) f32, rows in (h, w, n) order over the 4x4 pooled map.

        # ------------- stage 2: Conv2d(64,128,3,pad=1) -> leaky -> BN -> pool --
        # Zero-pad 5N rows on each side so every 3x3 tap shift is a static
        # contiguous sublane slice; w-validity handled by the precomputed mask.
        # The 9 tap blocks go along columns -> ONE K=576 MXU GEMM against w2.
        zpad = jnp.zeros((5 * N, SIZE), jnp.float32)
        p1pad = jnp.concatenate([zpad, pool1, zpad], axis=0)       # (26N, 64)
        blocks = []
        for di in range(3):
            for dj in range(3):
                t = di * 3 + dj
                off = 5 * N + ((di - 1) * 4 + (dj - 1)) * N
                blk = p1pad[off:off + 16 * N, :]                   # (16N, 64)
                if dj != 1:                                        # w-shifted taps
                    blk = blk * mask2_ref[:, t:t + 1]
                blocks.append(blk)
        s_cols = jnp.concatenate(blocks, axis=1).astype(jnp.bfloat16)  # (16N, 576)
        z2 = jnp.dot(s_cols, w2_ref[...], preferred_element_type=jnp.float32)
        z2 = leaky(z2 + b2_ref[...])                               # (16N, 128)
        scale, shift = bn_scale_shift(
            jnp.sum(z2, axis=0, keepdims=True),
            jnp.sum(z2 * z2, axis=0, keepdims=True),
            float(M2), g2_ref[...], be2_ref[...])

        # Pool window covers map positions (h, w) in {0,1}^2 -> rows r*N:(r+1)*N
        # for r in {0, 1, 4, 5} of the (h*4+w)*N + n ordered rows.  (N-row
        # sub-sublane slices: correct for any N, just a masked layout.)
        def nrm(r):
            return z2[r * N:(r + 1) * N, :] * scale + shift
        pool2 = jnp.maximum(jnp.maximum(nrm(0), nrm(1)),
                            jnp.maximum(nrm(4), nrm(5)))           # (N, 128)

        # ------------- stage 3: Conv2d(128,256,2,pad=1) on 1x1 -> ... ----------
        # Padded input (3x3) has its single real pixel at (1,1); output position
        # (oh, ow) only uses weight tap (1-oh, 1-ow).  The 4 taps are fused
        # along columns of w3 (128, 1024) -> ONE GEMM, 4 aligned column blocks.
        z3 = jnp.dot(pool2.astype(jnp.bfloat16), w3_ref[...],
                     preferred_element_type=jnp.float32)           # (N, 1024)
        blocks3 = [leaky(z3[:, p * C3:(p + 1) * C3] + b3_ref[...]) for p in range(4)]
        s3 = None
        sq3 = None
        for zb in blocks3:
            cs = jnp.sum(zb, axis=0, keepdims=True)
            cq = jnp.sum(zb * zb, axis=0, keepdims=True)
            s3 = cs if s3 is None else s3 + cs
            sq3 = cq if sq3 is None else sq3 + cq
        scale, shift = bn_scale_shift(s3, sq3, float(M3), g3_ref[...], be3_ref[...])
        pool3 = None                      # pool window covers all 4 positions
        for zb in blocks3:
            v = zb * scale + shift
            pool3 = v if pool3 is None else jnp.maximum(pool3, v)  # (N, 256)

        # ------------- layer4: Linear(256, 2*nout), bf16 MXU, lane-padded ------
        o_ref[...] = jnp.dot(pool3.astype(jnp.bfloat16), w4_ref[...],
                             preferred_element_type=jnp.float32) + b4_ref[...]

    return kernel


# ----------------------------------------------------------------------------
# One-time weight prep (hoisted out of the per-call path)
# ----------------------------------------------------------------------------
def prepare_params(params):
    """bf16 casts, im2col reshapes, stage-3 tap-column fusion, lane padding."""
    w3 = params["w3"]                                   # (2, 2, 128, 256) HWIO
    # column block p = oh*2+ow of the fused stage-3 weight holds tap (1-oh, 1-ow)
    w3_cols = jnp.concatenate([w3[1, 1], w3[1, 0], w3[0, 1], w3[0, 0]], axis=1)

    nout2 = params["w4"].shape[1]
    pad_to = max(128, ((nout2 + 127) // 128) * 128)     # lane-dense output store
    return dict(
        w1=params["w1"].reshape(4 * 4 * 1, SIZE).astype(jnp.bfloat16),
        b1=params["b1"], g1=params["g1"], be1=params["be1"],
        w2=params["w2"].reshape(9 * SIZE, 2 * SIZE).astype(jnp.bfloat16),
        b2=params["b2"], g2=params["g2"], be2=params["be2"],
        w3=w3_cols.astype(jnp.bfloat16),                # (128, 1024)
        b3=params["b3"], g3=params["g3"], be3=params["be3"],
        w4=jnp.pad(params["w4"], ((0, 0), (0, pad_to - nout2))).astype(jnp.bfloat16),
        b4=jnp.pad(params["b4"], ((0, 0), (0, pad_to - nout2))).astype(jnp.float32),
        nout2=nout2, pad_to=pad_to,
    )


# ----------------------------------------------------------------------------
# JAX wrapper (im2col in pool-friendly row order + pallas_call)
# ----------------------------------------------------------------------------
def nn_conv_v0_forward(x, kp, nsipms_side):
    """x: (N, nsipms) -> (N, nout*2). Mirrors NN_conv_v0.forward (train-mode BN)."""
    N = x.shape[0]
    assert nsipms_side == 16, "Linear(256) requires the conv/pool pipeline to reach 1x1"

    x_img = x.reshape(N, nsipms_side, nsipms_side).astype(jnp.float32)
    xp = jnp.pad(x_img, ((0, 0), (1, 1), (1, 1)))                  # (N, 18, 18)

    # Stage-1 im2col with the pool-friendly row order (trace-time numpy indices).
    n_idx, h_idx, w_idx = _stage1_row_order(N)
    di = np.repeat(np.arange(4), 4)        # patch flatten order (kh, kw), cin=1
    dj = np.tile(np.arange(4), 4)
    patches1 = xp[n_idx[:, None], h_idx[:, None] + di[None, :],
                  w_idx[:, None] + dj[None, :]].astype(jnp.bfloat16)  # (225N, 16)

    mask2 = jnp.asarray(_stage2_w_mask(N), jnp.float32)               # (16N, 9)

    vmem = pl.BlockSpec(memory_space=pltpu.MemorySpace.VMEM)
    out = pl.pallas_call(
        _make_fused_kernel(N),
        out_shape=jax.ShapeDtypeStruct((N, kp["pad_to"]), jnp.float32),
        in_specs=[vmem] * 16,
        out_specs=vmem,
        # Raise the scoped VMEM limit (defaults 16/32 MiB) while staying under
        # v7x's 64 MiB physical VMEM; everything here is O(N), not O(N^2).
        compiler_params=pltpu.CompilerParams(vmem_limit_bytes=48 * 1024 * 1024),
    )(patches1, mask2,
      kp["w1"], kp["b1"], kp["g1"], kp["be1"],
      kp["w2"], kp["b2"], kp["g2"], kp["be2"],
      kp["w3"], kp["b3"], kp["g3"], kp["be3"],
      kp["w4"], kp["b4"])
    return out[:, :kp["nout2"]]


# ----------------------------------------------------------------------------
# Deterministic parameter initialization (synthetic, matches module shapes)
# ----------------------------------------------------------------------------
def init_params(key, nout):
    ks = jax.random.split(key, 8)

    def conv_w(k, kh, kw, cin, cout):
        return (jax.random.normal(k, (kh, kw, cin, cout), jnp.float32)
                / jnp.sqrt(float(kh * kw * cin)))

    return dict(
        # layer1: Conv2d(1, 64, 4, padding=1)
        w1=conv_w(ks[0], 4, 4, 1, SIZE),
        b1=0.01 * jax.random.normal(ks[1], (1, SIZE), jnp.float32),
        g1=jnp.ones((1, SIZE), jnp.float32), be1=jnp.zeros((1, SIZE), jnp.float32),
        # layer2: Conv2d(64, 128, 3, padding=1)
        w2=conv_w(ks[2], 3, 3, SIZE, 2 * SIZE),
        b2=0.01 * jax.random.normal(ks[3], (1, 2 * SIZE), jnp.float32),
        g2=jnp.ones((1, 2 * SIZE), jnp.float32), be2=jnp.zeros((1, 2 * SIZE), jnp.float32),
        # layer3: Conv2d(128, 256, 2, padding=1)
        w3=conv_w(ks[4], 2, 2, 2 * SIZE, 4 * SIZE),
        b3=0.01 * jax.random.normal(ks[5], (1, 4 * SIZE), jnp.float32),
        g3=jnp.ones((1, 4 * SIZE), jnp.float32), be3=jnp.zeros((1, 4 * SIZE), jnp.float32),
        # layer4: Linear(256, nout*2)
        w4=jax.random.normal(ks[6], (4 * SIZE, 2 * nout), jnp.float32) / jnp.sqrt(4.0 * SIZE),
        b4=0.01 * jax.random.normal(ks[7], (1, 2 * nout), jnp.float32),
    )


if __name__ == "__main__":
    # nsipms = 256 -> side 16; the conv/pool pipeline collapses 16x16 to 1x1,
    # as required by Linear(256, nout*2).
    nsipms = 256
    nsipms_side = int(nsipms ** 0.5)
    nout = 4
    N = 2

    key = jax.random.PRNGKey(0)
    params = init_params(key, nout)
    kparams = prepare_params(params)      # one-time weight prep, outside the jit path
    x = jax.random.normal(jax.random.fold_in(key, 99), (N, nsipms), jnp.float32)

    fwd = jax.jit(lambda xx: nn_conv_v0_forward(xx, kparams, nsipms_side))
    out = fwd(x)
    jax.block_until_ready(out)
    assert out.shape == (N, 2 * nout), out.shape
    assert bool(jnp.all(jnp.isfinite(out)))
    print("KERNEL_OK")
</pallas_src>

<mosaic_0001>
module attributes {stable_mosaic.version = 11 : i64} {
  func.func @kernel(%arg0: memref<450x16xbf16, #tpu.memory_space<vmem>>, %arg1: memref<32x9xf32, #tpu.memory_space<vmem>>, %arg2: memref<16x64xbf16, #tpu.memory_space<vmem>>, %arg3: memref<1x64xf32, #tpu.memory_space<vmem>>, %arg4: memref<1x64xf32, #tpu.memory_space<vmem>>, %arg5: memref<1x64xf32, #tpu.memory_space<vmem>>, %arg6: memref<576x128xbf16, #tpu.memory_space<vmem>>, %arg7: memref<1x128xf32, #tpu.memory_space<vmem>>, %arg8: memref<1x128xf32, #tpu.memory_space<vmem>>, %arg9: memref<1x128xf32, #tpu.memory_space<vmem>>, %arg10: memref<128x1024xbf16, #tpu.memory_space<vmem>>, %arg11: memref<1x256xf32, #tpu.memory_space<vmem>>, %arg12: memref<1x256xf32, #tpu.memory_space<vmem>>, %arg13: memref<1x256xf32, #tpu.memory_space<vmem>>, %arg14: memref<256x128xbf16, #tpu.memory_space<vmem>>, %arg15: memref<1x128xf32, #tpu.memory_space<vmem>>, %arg16: memref<2x128xf32, #tpu.memory_space<vmem>>) attributes {dimension_semantics = [], scalar_prefetch = 0 : i64, scratch_operands = 0 : i64, tpu.core_type = #tpu.core_type<tc>} {
    %c0 = arith.constant 0 : index
    %c0_0 = arith.constant 0 : index
    %0 = vector.load %arg0[%c0, %c0_0] : memref<450x16xbf16, #tpu.memory_space<vmem>>, vector<450x16xbf16>
    %c0_1 = arith.constant 0 : index
    %c0_2 = arith.constant 0 : index
    %1 = vector.load %arg2[%c0_1, %c0_2] : memref<16x64xbf16, #tpu.memory_space<vmem>>, vector<16x64xbf16>
    %cst = arith.constant dense<0.000000e+00> : vector<450x64xf32>
    %2 = tpu.matmul %0, %1, %cst {dimension_numbers = #tpu.dot_dimension_numbers<[1], [0], [0], [1], [0, 0, 1, 1], [], []>} : vector<450x16xbf16>, vector<16x64xbf16>, vector<450x64xf32> -> vector<450x64xf32>
    %c0_3 = arith.constant 0 : index
    %c0_4 = arith.constant 0 : index
    %3 = vector.load %arg3[%c0_3, %c0_4] : memref<1x64xf32, #tpu.memory_space<vmem>>, vector<1x64xf32>
    %4 = vector.broadcast %3 : vector<1x64xf32> to vector<450x64xf32>
    %5 = arith.addf %2, %4 : vector<450x64xf32>
    %cst_5 = arith.constant 0.000000e+00 : f32
    %6 = vector.broadcast %cst_5 : f32 to vector<450x64xf32>
    %7 = arith.cmpf oge, %5, %6 : vector<450x64xf32>
    %cst_6 = arith.constant 0.00999999977 : f32
    %8 = vector.broadcast %cst_6 : f32 to vector<450x64xf32>
    %9 = arith.mulf %8, %5 : vector<450x64xf32>
    %10 = arith.select %7, %5, %9 : vector<450x64xi1>, vector<450x64xf32>
    %cst_7 = arith.constant dense<0.000000e+00> : vector<64xf32>
    %11 = vector.multi_reduction <add>, %10, %cst_7 [0] : vector<450x64xf32> to vector<64xf32>
    %12 = vector.shape_cast %11 : vector<64xf32> to vector<1x64xf32>
    %13 = arith.mulf %10, %10 : vector<450x64xf32>
    %cst_8 = arith.constant dense<0.000000e+00> : vector<64xf32>
    %14 = vector.multi_reduction <add>, %13, %cst_8 [0] : vector<450x64xf32> to vector<64xf32>
    %15 = vector.shape_cast %14 : vector<64xf32> to vector<1x64xf32>
    %c0_9 = arith.constant 0 : index
    %c0_10 = arith.constant 0 : index
    %16 = vector.load %arg4[%c0_9, %c0_10] : memref<1x64xf32, #tpu.memory_space<vmem>>, vector<1x64xf32>
    %c0_11 = arith.constant 0 : index
    %c0_12 = arith.constant 0 : index
    %17 = vector.load %arg5[%c0_11, %c0_12] : memref<1x64xf32, #tpu.memory_space<vmem>>, vector<1x64xf32>
    %cst_13 = arith.constant 0.00222222228 : f32
    %18 = vector.broadcast %cst_13 : f32 to vector<1x64xf32>
    %19 = arith.mulf %12, %18 : vector<1x64xf32>
    %cst_14 = arith.constant 0.00222222228 : f32
    %20 = vector.broadcast %cst_14 : f32 to vector<1x64xf32>
    %21 = arith.mulf %15, %20 : vector<1x64xf32>
    %22 = arith.mulf %19, %19 : vector<1x64xf32>
    %23 = arith.subf %21, %22 : vector<1x64xf32>
    %cst_15 = arith.constant 0.000000e+00 : f32
    %24 = vector.broadcast %cst_15 : f32 to vector<1x64xf32>
    %25 = arith.maximumf %23, %24 : vector<1x64xf32>
    %cst_16 = arith.constant 9.99999974E-6 : f32
    %26 = vector.broadcast %cst_16 : f32 to vector<1x64xf32>
    %27 = arith.addf %25, %26 : vector<1x64xf32>
    %28 = math.rsqrt %27 : vector<1x64xf32>
    %29 = arith.mulf %16, %28 : vector<1x64xf32>
    %30 = arith.mulf %19, %29 : vector<1x64xf32>
    %31 = arith.subf %17, %30 : vector<1x64xf32>
    %32 = vector.extract_strided_slice %10 {offsets = [0, 0], sizes = [128, 64], strides = [1, 1]} : vector<450x64xf32> to vector<128x64xf32>
    %33 = vector.broadcast %29 : vector<1x64xf32> to vector<128x64xf32>
    %34 = arith.mulf %32, %33 : vector<128x64xf32>
    %35 = vector.broadcast %31 : vector<1x64xf32> to vector<128x64xf32>
    %36 = arith.addf %34, %35 : vector<128x64xf32>
    %37 = vector.extract_strided_slice %36 {offsets = [0, 0], sizes = [32, 64], strides = [1, 1]} : vector<128x64xf32> to vector<32x64xf32>
    %38 = vector.extract_strided_slice %36 {offsets = [32, 0], sizes = [32, 64], strides = [1, 1]} : vector<128x64xf32> to vector<32x64xf32>
    %39 = arith.maximumf %37, %38 : vector<32x64xf32>
    %40 = vector.extract_strided_slice %36 {offsets = [64, 0], sizes = [32, 64], strides = [1, 1]} : vector<128x64xf32> to vector<32x64xf32>
    %41 = vector.extract_strided_slice %36 {offsets = [96, 0], sizes = [32, 64], strides = [1, 1]} : vector<128x64xf32> to vector<32x64xf32>
    %42 = arith.maximumf %40, %41 : vector<32x64xf32>
    %43 = arith.maximumf %39, %42 : vector<32x64xf32>
    %cst_17 = arith.constant 0.000000e+00 : f32
    %44 = vector.broadcast %cst_17 : f32 to vector<10x64xf32>
    %45 = tpu.concatenate %44, %43, %44 in 0 : vector<10x64xf32>, vector<32x64xf32>, vector<10x64xf32> -> vector<52x64xf32>
    %46 = vector.extract_strided_slice %45 {offsets = [0, 0], sizes = [32, 64], strides = [1, 1]} : vector<52x64xf32> to vector<32x64xf32>
    %c0_18 = arith.constant 0 : index
    %c0_19 = arith.constant 0 : index
    %47 = vector.load %arg1[%c0_18, %c0_19] : memref<32x9xf32, #tpu.memory_space<vmem>>, vector<32x1xf32>
    %48 = vector.broadcast %47 : vector<32x1xf32> to vector<32x64xf32>
    %49 = arith.mulf %46, %48 : vector<32x64xf32>
    %50 = vector.extract_strided_slice %45 {offsets = [2, 0], sizes = [32, 64], strides = [1, 1]} : vector<52x64xf32> to vector<32x64xf32>
    %51 = vector.extract_strided_slice %45 {offsets = [4, 0], sizes = [32, 64], strides = [1, 1]} : vector<52x64xf32> to vector<32x64xf32>
    %c0_20 = arith.constant 0 : index
    %c2 = arith.constant 2 : index
    %52 = vector.load %arg1[%c0_20, %c2] : memref<32x9xf32, #tpu.memory_space<vmem>>, vector<32x1xf32>
    %53 = vector.broadcast %52 : vector<32x1xf32> to vector<32x64xf32>
    %54 = arith.mulf %51, %53 : vector<32x64xf32>
    %55 = vector.extract_strided_slice %45 {offsets = [8, 0], sizes = [32, 64], strides = [1, 1]} : vector<52x64xf32> to vector<32x64xf32>
    %c0_21 = arith.constant 0 : index
    %c3 = arith.constant 3 : index
    %56 = vector.load %arg1[%c0_21, %c3] : memref<32x9xf32, #tpu.memory_space<vmem>>, vector<32x1xf32>
    %57 = vector.broadcast %56 : vector<32x1xf32> to vector<32x64xf32>
    %58 = arith.mulf %55, %57 : vector<32x64xf32>
    %59 = vector.extract_strided_slice %45 {offsets = [10, 0], sizes = [32, 64], strides = [1, 1]} : vector<52x64xf32> to vector<32x64xf32>
    %60 = vector.extract_strided_slice %45 {offsets = [12, 0], sizes = [32, 64], strides = [1, 1]} : vector<52x64xf32> to vector<32x64xf32>
    %c0_22 = arith.constant 0 : index
    %c5 = arith.constant 5 : index
    %61 = vector.load %arg1[%c0_22, %c5] : memref<32x9xf32, #tpu.memory_space<vmem>>, vector<32x1xf32>
    %62 = vector.broadcast %61 : vector<32x1xf32> to vector<32x64xf32>
    %63 = arith.mulf %60, %62 : vector<32x64xf32>
    %64 = vector.extract_strided_slice %45 {offsets = [16, 0], sizes = [32, 64], strides = [1, 1]} : vector<52x64xf32> to vector<32x64xf32>
    %c0_23 = arith.constant 0 : index
    %c6 = arith.constant 6 : index
    %65 = vector.load %arg1[%c0_23, %c6] : memref<32x9xf32, #tpu.memory_space<vmem>>, vector<32x1xf32>
    %66 = vector.broadcast %65 : vector<32x1xf32> to vector<32x64xf32>
    %67 = arith.mulf %64, %66 : vector<32x64xf32>
    %68 = vector.extract_strided_slice %45 {offsets = [18, 0], sizes = [32, 64], strides = [1, 1]} : vector<52x64xf32> to vector<32x64xf32>
    %69 = vector.extract_strided_slice %45 {offsets = [20, 0], sizes = [32, 64], strides = [1, 1]} : vector<52x64xf32> to vector<32x64xf32>
    %c0_24 = arith.constant 0 : index
    %c8 = arith.constant 8 : index
    %70 = vector.load %arg1[%c0_24, %c8] : memref<32x9xf32, #tpu.memory_space<vmem>>, vector<32x1xf32>
    %71 = vector.broadcast %70 : vector<32x1xf32> to vector<32x64xf32>
    %72 = arith.mulf %69, %71 : vector<32x64xf32>
    %73 = tpu.concatenate %49, %50, %54, %58, %59, %63, %67, %68, %72 in 1 : vector<32x64xf32>, vector<32x64xf32>, vector<32x64xf32>, vector<32x64xf32>, vector<32x64xf32>, vector<32x64xf32>, vector<32x64xf32>, vector<32x64xf32>, vector<32x64xf32> -> vector<32x576xf32>
    %74 = arith.truncf %73 : vector<32x576xf32> to vector<32x576xbf16>
    %c0_25 = arith.constant 0 : index
    %c0_26 = arith.constant 0 : index
    %75 = vector.load %arg6[%c0_25, %c0_26] : memref<576x128xbf16, #tpu.memory_space<vmem>>, vector<576x128xbf16>
    %cst_27 = arith.constant dense<0.000000e+00> : vector<32x128xf32>
    %76 = tpu.matmul %74, %75, %cst_27 {dimension_numbers = #tpu.dot_dimension_numbers<[1], [0], [0], [1], [0, 0, 1, 1], [], []>} : vector<32x576xbf16>, vector<576x128xbf16>, vector<32x128xf32> -> vector<32x128xf32>
    %c0_28 = arith.constant 0 : index
    %c0_29 = arith.constant 0 : index
    %77 = vector.load %arg7[%c0_28, %c0_29] : memref<1x128xf32, #tpu.memory_space<vmem>>, vector<1x128xf32>
    %78 = vector.broadcast %77 : vector<1x128xf32> to vector<32x128xf32>
    %79 = arith.addf %76, %78 : vector<32x128xf32>
    %cst_30 = arith.constant 0.000000e+00 : f32
    %80 = vector.broadcast %cst_30 : f32 to vector<32x128xf32>
    %81 = arith.cmpf oge, %79, %80 : vector<32x128xf32>
    %cst_31 = arith.constant 0.00999999977 : f32
    %82 = vector.broadcast %cst_31 : f32 to vector<32x128xf32>
    %83 = arith.mulf %82, %79 : vector<32x128xf32>
    %84 = arith.select %81, %79, %83 : vector<32x128xi1>, vector<32x128xf32>
    %cst_32 = arith.constant dense<0.000000e+00> : vector<128xf32>
    %85 = vector.multi_reduction <add>, %84, %cst_32 [0] : vector<32x128xf32> to vector<128xf32>
    %86 = vector.shape_cast %85 : vector<128xf32> to vector<1x128xf32>
    %87 = arith.mulf %84, %84 : vector<32x128xf32>
    %cst_33 = arith.constant dense<0.000000e+00> : vector<128xf32>
    %88 = vector.multi_reduction <add>, %87, %cst_33 [0] : vector<32x128xf32> to vector<128xf32>
    %89 = vector.shape_cast %88 : vector<128xf32> to vector<1x128xf32>
    %c0_34 = arith.constant 0 : index
    %c0_35 = arith.constant 0 : index
    %90 = vector.load %arg8[%c0_34, %c0_35] : memref<1x128xf32, #tpu.memory_space<vmem>>, vector<1x128xf32>
    %c0_36 = arith.constant 0 : index
    %c0_37 = arith.constant 0 : index
    %91 = vector.load %arg9[%c0_36, %c0_37] : memref<1x128xf32, #tpu.memory_space<vmem>>, vector<1x128xf32>
    %cst_38 = arith.constant 3.125000e-02 : f32
    %92 = vector.broadcast %cst_38 : f32 to vector<1x128xf32>
    %93 = arith.mulf %86, %92 : vector<1x128xf32>
    %cst_39 = arith.constant 3.125000e-02 : f32
    %94 = vector.broadcast %cst_39 : f32 to vector<1x128xf32>
    %95 = arith.mulf %89, %94 : vector<1x128xf32>
    %96 = arith.mulf %93, %93 : vector<1x128xf32>
    %97 = arith.subf %95, %96 : vector<1x128xf32>
    %cst_40 = arith.constant 0.000000e+00 : f32
    %98 = vector.broadcast %cst_40 : f32 to vector<1x128xf32>
    %99 = arith.maximumf %97, %98 : vector<1x128xf32>
    %cst_41 = arith.constant 9.99999974E-6 : f32
    %100 = vector.broadcast %cst_41 : f32 to vector<1x128xf32>
    %101 = arith.addf %99, %100 : vector<1x128xf32>
    %102 = math.rsqrt %101 : vector<1x128xf32>
    %103 = arith.mulf %90, %102 : vector<1x128xf32>
    %104 = arith.mulf %93, %103 : vector<1x128xf32>
    %105 = arith.subf %91, %104 : vector<1x128xf32>
    %106 = vector.extract_strided_slice %84 {offsets = [0, 0], sizes = [2, 128], strides = [1, 1]} : vector<32x128xf32> to vector<2x128xf32>
    %107 = vector.broadcast %103 : vector<1x128xf32> to vector<2x128xf32>
    %108 = arith.mulf %106, %107 : vector<2x128xf32>
    %109 = vector.broadcast %105 : vector<1x128xf32> to vector<2x128xf32>
    %110 = arith.addf %108, %109 : vector<2x128xf32>
    %111 = vector.extract_strided_slice %84 {offsets = [2, 0], sizes = [2, 128], strides = [1, 1]} : vector<32x128xf32> to vector<2x128xf32>
    %112 = vector.broadcast %103 : vector<1x128xf32> to vector<2x128xf32>
    %113 = arith.mulf %111, %112 : vector<2x128xf32>
    %114 = vector.broadcast %105 : vector<1x128xf32> to vector<2x128xf32>
    %115 = arith.addf %113, %114 : vector<2x128xf32>
    %116 = arith.maximumf %110, %115 : vector<2x128xf32>
    %117 = vector.extract_strided_slice %84 {offsets = [8, 0], sizes = [2, 128], strides = [1, 1]} : vector<32x128xf32> to vector<2x128xf32>
    %118 = vector.broadcast %103 : vector<1x128xf32> to vector<2x128xf32>
    %119 = arith.mulf %117, %118 : vector<2x128xf32>
    %120 = vector.broadcast %105 : vector<1x128xf32> to vector<2x128xf32>
    %121 = arith.addf %119, %120 : vector<2x128xf32>
    %122 = vector.extract_strided_slice %84 {offsets = [10, 0], sizes = [2, 128], strides = [1, 1]} : vector<32x128xf32> to vector<2x128xf32>
    %123 = vector.broadcast %103 : vector<1x128xf32> to vector<2x128xf32>
    %124 = arith.mulf %122, %123 : vector<2x128xf32>
    %125 = vector.broadcast %105 : vector<1x128xf32> to vector<2x128xf32>
    %126 = arith.addf %124, %125 : vector<2x128xf32>
    %127 = arith.maximumf %121, %126 : vector<2x128xf32>
    %128 = arith.maximumf %116, %127 : vector<2x128xf32>
    %129 = arith.truncf %128 : vector<2x128xf32> to vector<2x128xbf16>
    %c0_42 = arith.constant 0 : index
    %c0_43 = arith.constant 0 : index
    %130 = vector.load %arg10[%c0_42, %c0_43] : memref<128x1024xbf16, #tpu.memory_space<vmem>>, vector<128x1024xbf16>
    %cst_44 = arith.constant dense<0.000000e+00> : vector<2x1024xf32>
    %131 = tpu.matmul %129, %130, %cst_44 {dimension_numbers = #tpu.dot_dimension_numbers<[1], [0], [0], [1], [0, 0, 1, 1], [], []>} : vector<2x128xbf16>, vector<128x1024xbf16>, vector<2x1024xf32> -> vector<2x1024xf32>
    %132 = vector.extract_strided_slice %131 {offsets = [0, 0], sizes = [2, 256], strides = [1, 1]} : vector<2x1024xf32> to vector<2x256xf32>
    %c0_45 = arith.constant 0 : index
    %c0_46 = arith.constant 0 : index
    %133 = vector.load %arg11[%c0_45, %c0_46] : memref<1x256xf32, #tpu.memory_space<vmem>>, vector<1x256xf32>
    %134 = vector.broadcast %133 : vector<1x256xf32> to vector<2x256xf32>
    %135 = arith.addf %132, %134 : vector<2x256xf32>
    %cst_47 = arith.constant 0.000000e+00 : f32
    %136 = vector.broadcast %cst_47 : f32 to vector<2x256xf32>
    %137 = arith.cmpf oge, %135, %136 : vector<2x256xf32>
    %cst_48 = arith.constant 0.00999999977 : f32
    %138 = vector.broadcast %cst_48 : f32 to vector<2x256xf32>
    %139 = arith.mulf %138, %135 : vector<2x256xf32>
    %140 = arith.select %137, %135, %139 : vector<2x256xi1>, vector<2x256xf32>
    %141 = vector.extract_strided_slice %131 {offsets = [0, 256], sizes = [2, 256], strides = [1, 1]} : vector<2x1024xf32> to vector<2x256xf32>
    %c0_49 = arith.constant 0 : index
    %c0_50 = arith.constant 0 : index
    %142 = vector.load %arg11[%c0_49, %c0_50] : memref<1x256xf32, #tpu.memory_space<vmem>>, vector<1x256xf32>
    %143 = vector.broadcast %142 : vector<1x256xf32> to vector<2x256xf32>
    %144 = arith.addf %141, %143 : vector<2x256xf32>
    %cst_51 = arith.constant 0.000000e+00 : f32
    %145 = vector.broadcast %cst_51 : f32 to vector<2x256xf32>
    %146 = arith.cmpf oge, %144, %145 : vector<2x256xf32>
    %cst_52 = arith.constant 0.00999999977 : f32
    %147 = vector.broadcast %cst_52 : f32 to vector<2x256xf32>
    %148 = arith.mulf %147, %144 : vector<2x256xf32>
    %149 = arith.select %146, %144, %148 : vector<2x256xi1>, vector<2x256xf32>
    %150 = vector.extract_strided_slice %131 {offsets = [0, 512], sizes = [2, 256], strides = [1, 1]} : vector<2x1024xf32> to vector<2x256xf32>
    %c0_53 = arith.constant 0 : index
    %c0_54 = arith.constant 0 : index
    %151 = vector.load %arg11[%c0_53, %c0_54] : memref<1x256xf32, #tpu.memory_space<vmem>>, vector<1x256xf32>
    %152 = vector.broadcast %151 : vector<1x256xf32> to vector<2x256xf32>
    %153 = arith.addf %150, %152 : vector<2x256xf32>
    %cst_55 = arith.constant 0.000000e+00 : f32
    %154 = vector.broadcast %cst_55 : f32 to vector<2x256xf32>
    %155 = arith.cmpf oge, %153, %154 : vector<2x256xf32>
    %cst_56 = arith.constant 0.00999999977 : f32
    %156 = vector.broadcast %cst_56 : f32 to vector<2x256xf32>
    %157 = arith.mulf %156, %153 : vector<2x256xf32>
    %158 = arith.select %155, %153, %157 : vector<2x256xi1>, vector<2x256xf32>
    %159 = vector.extract_strided_slice %131 {offsets = [0, 768], sizes = [2, 256], strides = [1, 1]} : vector<2x1024xf32> to vector<2x256xf32>
    %c0_57 = arith.constant 0 : index
    %c0_58 = arith.constant 0 : index
    %160 = vector.load %arg11[%c0_57, %c0_58] : memref<1x256xf32, #tpu.memory_space<vmem>>, vector<1x256xf32>
    %161 = vector.broadcast %160 : vector<1x256xf32> to vector<2x256xf32>
    %162 = arith.addf %159, %161 : vector<2x256xf32>
    %cst_59 = arith.constant 0.000000e+00 : f32
    %163 = vector.broadcast %cst_59 : f32 to vector<2x256xf32>
    %164 = arith.cmpf oge, %162, %163 : vector<2x256xf32>
    %cst_60 = arith.constant 0.00999999977 : f32
    %165 = vector.broadcast %cst_60 : f32 to vector<2x256xf32>
    %166 = arith.mulf %165, %162 : vector<2x256xf32>
    %167 = arith.select %164, %162, %166 : vector<2x256xi1>, vector<2x256xf32>
    %cst_61 = arith.constant dense<0.000000e+00> : vector<256xf32>
    %168 = vector.multi_reduction <add>, %140, %cst_61 [0] : vector<2x256xf32> to vector<256xf32>
    %169 = vector.shape_cast %168 : vector<256xf32> to vector<1x256xf32>
    %170 = arith.mulf %140, %140 : vector<2x256xf32>
    %cst_62 = arith.constant dense<0.000000e+00> : vector<256xf32>
    %171 = vector.multi_reduction <add>, %170, %cst_62 [0] : vector<2x256xf32> to vector<256xf32>
    %172 = vector.shape_cast %171 : vector<256xf32> to vector<1x256xf32>
    %cst_63 = arith.constant dense<0.000000e+00> : vector<256xf32>
    %173 = vector.multi_reduction <add>, %149, %cst_63 [0] : vector<2x256xf32> to vector<256xf32>
    %174 = vector.shape_cast %173 : vector<256xf32> to vector<1x256xf32>
    %175 = arith.mulf %149, %149 : vector<2x256xf32>
    %cst_64 = arith.constant dense<0.000000e+00> : vector<256xf32>
    %176 = vector.multi_reduction <add>, %175, %cst_64 [0] : vector<2x256xf32> to vector<256xf32>
    %177 = vector.shape_cast %176 : vector<256xf32> to vector<1x256xf32>
    %178 = arith.addf %169, %174 : vector<1x256xf32>
    %179 = arith.addf %172, %177 : vector<1x256xf32>
    %cst_65 = arith.constant dense<0.000000e+00> : vector<256xf32>
    %180 = vector.multi_reduction <add>, %158, %cst_65 [0] : vector<2x256xf32> to vector<256xf32>
    %181 = vector.shape_cast %180 : vector<256xf32> to vector<1x256xf32>
    %182 = arith.mulf %158, %158 : vector<2x256xf32>
    %cst_66 = arith.constant dense<0.000000e+00> : vector<256xf32>
    %183 = vector.multi_reduction <add>, %182, %cst_66 [0] : vector<2x256xf32> to vector<256xf32>
    %184 = vector.shape_cast %183 : vector<256xf32> to vector<1x256xf32>
    %185 = arith.addf %178, %181 : vector<1x256xf32>
    %186 = arith.addf %179, %184 : vector<1x256xf32>
    %cst_67 = arith.constant dense<0.000000e+00> : vector<256xf32>
    %187 = vector.multi_reduction <add>, %167, %cst_67 [0] : vector<2x256xf32> to vector<256xf32>
    %188 = vector.shape_cast %187 : vector<256xf32> to vector<1x256xf32>
    %189 = arith.mulf %167, %167 : vector<2x256xf32>
    %cst_68 = arith.constant dense<0.000000e+00> : vector<256xf32>
    %190 = vector.multi_reduction <add>, %189, %cst_68 [0] : vector<2x256xf32> to vector<256xf32>
    %191 = vector.shape_cast %190 : vector<256xf32> to vector<1x256xf32>
    %192 = arith.addf %185, %188 : vector<1x256xf32>
    %193 = arith.addf %186, %191 : vector<1x256xf32>
    %c0_69 = arith.constant 0 : index
    %c0_70 = arith.constant 0 : index
    %194 = vector.load %arg12[%c0_69, %c0_70] : memref<1x256xf32, #tpu.memory_space<vmem>>, vector<1x256xf32>
    %c0_71 = arith.constant 0 : index
    %c0_72 = arith.constant 0 : index
    %195 = vector.load %arg13[%c0_71, %c0_72] : memref<1x256xf32, #tpu.memory_space<vmem>>, vector<1x256xf32>
    %cst_73 = arith.constant 1.250000e-01 : f32
    %196 = vector.broadcast %cst_73 : f32 to vector<1x256xf32>
    %197 = arith.mulf %192, %196 : vector<1x256xf32>
    %cst_74 = arith.constant 1.250000e-01 : f32
    %198 = vector.broadcast %cst_74 : f32 to vector<1x256xf32>
    %199 = arith.mulf %193, %198 : vector<1x256xf32>
    %200 = arith.mulf %197, %197 : vector<1x256xf32>
    %201 = arith.subf %199, %200 : vector<1x256xf32>
    %cst_75 = arith.constant 0.000000e+00 : f32
    %202 = vector.broadcast %cst_75 : f32 to vector<1x256xf32>
    %203 = arith.maximumf %201, %202 : vector<1x256xf32>
    %cst_76 = arith.constant 9.99999974E-6 : f32
    %204 = vector.broadcast %cst_76 : f32 to vector<1x256xf32>
    %205 = arith.addf %203, %204 : vector<1x256xf32>
    %206 = math.rsqrt %205 : vector<1x256xf32>
    %207 = arith.mulf %194, %206 : vector<1x256xf32>
    %208 = arith.mulf %197, %207 : vector<1x256xf32>
    %209 = arith.subf %195, %208 : vector<1x256xf32>
    %210 = vector.broadcast %207 : vector<1x256xf32> to vector<2x256xf32>
    %211 = arith.mulf %140, %210 : vector<2x256xf32>
    %212 = vector.broadcast %209 : vector<1x256xf32> to vector<2x256xf32>
    %213 = arith.addf %211, %212 : vector<2x256xf32>
    %214 = vector.broadcast %207 : vector<1x256xf32> to vector<2x256xf32>
    %215 = arith.mulf %149, %214 : vector<2x256xf32>
    %216 = vector.broadcast %209 : vector<1x256xf32> to vector<2x256xf32>
    %217 = arith.addf %215, %216 : vector<2x256xf32>
    %218 = arith.maximumf %213, %217 : vector<2x256xf32>
    %219 = vector.broadcast %207 : vector<1x256xf32> to vector<2x256xf32>
    %220 = arith.mulf %158, %219 : vector<2x256xf32>
    %221 = vector.broadcast %209 : vector<1x256xf32> to vector<2x256xf32>
    %222 = arith.addf %220, %221 : vector<2x256xf32>
    %223 = arith.maximumf %218, %222 : vector<2x256xf32>
    %224 = vector.broadcast %207 : vector<1x256xf32> to vector<2x256xf32>
    %225 = arith.mulf %167, %224 : vector<2x256xf32>
    %226 = vector.broadcast %209 : vector<1x256xf32> to vector<2x256xf32>
    %227 = arith.addf %225, %226 : vector<2x256xf32>
    %228 = arith.maximumf %223, %227 : vector<2x256xf32>
    %229 = arith.truncf %228 : vector<2x256xf32> to vector<2x256xbf16>
    %c0_77 = arith.constant 0 : index
    %c0_78 = arith.constant 0 : index
    %230 = vector.load %arg14[%c0_77, %c0_78] : memref<256x128xbf16, #tpu.memory_space<vmem>>, vector<256x128xbf16>
    %cst_79 = arith.constant dense<0.000000e+00> : vector<2x128xf32>
    %231 = tpu.matmul %229, %230, %cst_79 {dimension_numbers = #tpu.dot_dimension_numbers<[1], [0], [0], [1], [0, 0, 1, 1], [], []>} : vector<2x256xbf16>, vector<256x128xbf16>, vector<2x128xf32> -> vector<2x128xf32>
    %c0_80 = arith.constant 0 : index
    %c0_81 = arith.constant 0 : index
    %232 = vector.load %arg15[%c0_80, %c0_81] : memref<1x128xf32, #tpu.memory_space<vmem>>, vector<1x128xf32>
    %233 = vector.broadcast %232 : vector<1x128xf32> to vector<2x128xf32>
    %234 = arith.addf %231, %233 : vector<2x128xf32>
    %c0_82 = arith.constant 0 : index
    %c0_83 = arith.constant 0 : index
    %235 = vector.load %arg16[%c0_82, %c0_83] : memref<2x128xf32, #tpu.memory_space<vmem>>, vector<2x128xf32>
    tpu.vector_store %arg16[%c0_82, %c0_83], %234 {strides = array<i32>} : memref<2x128xf32, #tpu.memory_space<vmem>>, vector<2x128xf32>,
    return
  }
}

</mosaic_0001>

<llo_original>
// kernel: _lambda_.1
$region0: #{_lambda_.1}
  #allocation0 [shape = 'u32[]', space=smem, size = 0x4, offset = 0x4, fixed_abs, tag = 'smem constant byte address 0x4 - core index']
  #allocation1 [shape = 'u32[144,128]{1,0:T(1,128)}', space=vmem, size = 0x12000, scoped, tag = 'internal scratch']
  %s0 = inlined_call_operand.vmem [shape: bf16[450,16], index: 0, kind: input, shape index: {}]
  %s1 = inlined_call_operand.vmem [shape: f32[32,9], index: 1, kind: input, shape index: {}]
  %s2 = inlined_call_operand.vmem [shape: bf16[16,64], index: 2, kind: input, shape index: {}]
  %s3 = inlined_call_operand.vmem [shape: f32[1,64], index: 3, kind: input, shape index: {}]
  %s4 = inlined_call_operand.vmem [shape: f32[1,64], index: 4, kind: input, shape index: {}]
  %s5 = inlined_call_operand.vmem [shape: f32[1,64], index: 5, kind: input, shape index: {}]
  %s6 = inlined_call_operand.vmem [shape: bf16[576,128], index: 6, kind: input, shape index: {}]
  %s7 = inlined_call_operand.vmem [shape: f32[1,128], index: 7, kind: input, shape index: {}]
  %s8 = inlined_call_operand.vmem [shape: f32[1,128], index: 8, kind: input, shape index: {}]
  %s9 = inlined_call_operand.vmem [shape: f32[1,128], index: 9, kind: input, shape index: {}]
  %s10 = inlined_call_operand.vmem [shape: bf16[128,1024], index: 10, kind: input, shape index: {}]
  %s11 = inlined_call_operand.vmem [shape: f32[1,256], index: 11, kind: input, shape index: {}]
  %s12 = inlined_call_operand.vmem [shape: f32[1,256], index: 12, kind: input, shape index: {}]
  %s13 = inlined_call_operand.vmem [shape: f32[1,256], index: 13, kind: input, shape index: {}]
  %s14 = inlined_call_operand.vmem [shape: bf16[256,128], index: 14, kind: input, shape index: {}]
  %s15 = inlined_call_operand.vmem [shape: f32[1,128], index: 15, kind: input, shape index: {}]
  %s16 = inlined_call_operand.hbm [shape: f32[2,128], index: 16, kind: output, shape index: {}]
  %s17 = sld [smem:[#allocation0]]
  $region74: #{_lambda_.1} parent=0
    _
  %s19 = ssub.s32 1, %s17
  %s20 = scalar_select 0, %s19, %s17
  $region1: #{_lambda_.1} parent=0
    #allocation2 [shape = 'u8[1024]{0}', space=vmem, size = 0x400, scoped, tag = 'output window, operand 0, single buffered']
    #allocation3 [shape = 's32[1]{0}', space=sflag, size = 0x4, scoped, tag = 'scoped memory for _lambda_.1']
    %21 = vsyncpa [#allocation3], 0
    // Predicated region
    $region2: #{_lambda_.1} parent=1 // pred_check
      _
    $region3: #{_lambda_.1} parent=1 // pred_check_branch
      %23 = sbr.rel (0) target = $region5
    $region4: #{_lambda_.1} parent=1 // pred_region
      _
    $region5: #{_lambda_.1} parent=1 // pred_fallthru
      _
    // Predicated region
    $region6: #{_lambda_.1} parent=1 // pred_check
      _
    $region7: #{_lambda_.1} parent=1 // pred_check_branch
      %25 = sbr.rel (0) target = $region9
    $region8: #{_lambda_.1} parent=1 // pred_region
      _
    $region9: #{_lambda_.1} parent=1 // pred_fallthru
      _
    // Predicated region
    $region10: #{_lambda_.1} parent=1 // pred_check
      _
    $region11: #{_lambda_.1} parent=1 // pred_check_branch
      %27 = sbr.rel (0) target = $region13
    $region12: #{_lambda_.1} parent=1 // pred_region
      _
    $region13: #{_lambda_.1} parent=1 // pred_fallthru
      _
    // Predicated region
    $region14: #{_lambda_.1} parent=1 // pred_check
      _
    $region15: #{_lambda_.1} parent=1 // pred_check_branch
      %29 = sbr.rel (0) target = $region17
    $region16: #{_lambda_.1} parent=1 // pred_region
      _
    $region17: #{_lambda_.1} parent=1 // pred_fallthru
      _
    // Predicated region
    $region18: #{_lambda_.1} parent=1 // pred_check
      _
    $region19: #{_lambda_.1} parent=1 // pred_check_branch
      %31 = sbr.rel (0) target = $region21
    $region20: #{_lambda_.1} parent=1 // pred_region
      _
    $region21: #{_lambda_.1} parent=1 // pred_fallthru
      _
    // Predicated region
    $region22: #{_lambda_.1} parent=1 // pred_check
      _
    $region23: #{_lambda_.1} parent=1 // pred_check_branch
      %33 = sbr.rel (0) target = $region25
    $region24: #{_lambda_.1} parent=1 // pred_region
      _
    $region25: #{_lambda_.1} parent=1 // pred_fallthru
      _
    // Predicated region
    $region26: #{_lambda_.1} parent=1 // pred_check
      _
    $region27: #{_lambda_.1} parent=1 // pred_check_branch
      %35 = sbr.rel (0) target = $region29
    $region28: #{_lambda_.1} parent=1 // pred_region
      _
    $region29: #{_lambda_.1} parent=1 // pred_fallthru
      _
    // Predicated region
    $region30: #{_lambda_.1} parent=1 // pred_check
      _
    $region31: #{_lambda_.1} parent=1 // pred_check_branch
      %37 = sbr.rel (0) target = $region33
    $region32: #{_lambda_.1} parent=1 // pred_region
      _
    $region33: #{_lambda_.1} parent=1 // pred_fallthru
      _
    // Predicated region
    $region34: #{_lambda_.1} parent=1 // pred_check
      _
    $region35: #{_lambda_.1} parent=1 // pred_check_branch
      %39 = sbr.rel (0) target = $region37
    $region36: #{_lambda_.1} parent=1 // pred_region
      _
    $region37: #{_lambda_.1} parent=1 // pred_fallthru
      _
    // Predicated region
    $region38: #{_lambda_.1} parent=1 // pred_check
      _
    $region39: #{_lambda_.1} parent=1 // pred_check_branch
      %41 = sbr.rel (0) target = $region41
    $region40: #{_lambda_.1} parent=1 // pred_region
      _
    $region41: #{_lambda_.1} parent=1 // pred_fallthru
      _
    // Predicated region
    $region42: #{_lambda_.1} parent=1 // pred_check
      _
    $region43: #{_lambda_.1} parent=1 // pred_check_branch
      %43 = sbr.rel (0) target = $region45
    $region44: #{_lambda_.1} parent=1 // pred_region
      _
    $region45: #{_lambda_.1} parent=1 // pred_fallthru
      _
    // Predicated region
    $region46: #{_lambda_.1} parent=1 // pred_check
      _
    $region47: #{_lambda_.1} parent=1 // pred_check_branch
      %45 = sbr.rel (0) target = $region49
    $region48: #{_lambda_.1} parent=1 // pred_region
      _
    $region49: #{_lambda_.1} parent=1 // pred_fallthru
      _
    // Predicated region
    $region50: #{_lambda_.1} parent=1 // pred_check
      _
    $region51: #{_lambda_.1} parent=1 // pred_check_branch
      %47 = sbr.rel (0) target = $region53
    $region52: #{_lambda_.1} parent=1 // pred_region
      _
    $region53: #{_lambda_.1} parent=1 // pred_fallthru
      _
    // Predicated region
    $region54: #{_lambda_.1} parent=1 // pred_check
      _
    $region55: #{_lambda_.1} parent=1 // pred_check_branch
      %49 = sbr.rel (0) target = $region57
    $region56: #{_lambda_.1} parent=1 // pred_region
      _
    $region57: #{_lambda_.1} parent=1 // pred_fallthru
      _
    // Predicated region
    $region58: #{_lambda_.1} parent=1 // pred_check
      _
    $region59: #{_lambda_.1} parent=1 // pred_check_branch
      %51 = sbr.rel (0) target = $region61
    $region60: #{_lambda_.1} parent=1 // pred_region
      _
    $region61: #{_lambda_.1} parent=1 // pred_fallthru
      _
    // Predicated region
    $region62: #{_lambda_.1} parent=1 // pred_check
      _
    $region63: #{_lambda_.1} parent=1 // pred_check_branch
      %53 = sbr.rel (0) target = $region65
    $region64: #{_lambda_.1} parent=1 // pred_region
      _
    $region65: #{_lambda_.1} parent=1 // pred_fallthru
      _
    %v55 = vld [vmem:[%s0] sm:$0xf]
    %v56 = vld [vmem:[%s0 + $0x4] sm:$0xf]
    %v57 = vld [vmem:[%s0 + $0x8] sm:$0xf]
    %v58 = vld [vmem:[%s0 + $0xc] sm:$0xf]
    %v59 = vld [vmem:[%s0 + $0x10] sm:$0xf]
    %v60 = vld [vmem:[%s0 + $0x14] sm:$0xf]
    %v61 = vld [vmem:[%s0 + $0x18] sm:$0xf]
    %v62 = vld [vmem:[%s0 + $0x1c] sm:$0xf]
    %v63 = vld [vmem:[%s0 + $0x20] sm:$0xf]
    %v64 = vld [vmem:[%s0 + $0x24] sm:$0xf]
    %v65 = vld [vmem:[%s0 + $0x28] sm:$0xf]
    %v66 = vld [vmem:[%s0 + $0x2c] sm:$0xf]
    %v67 = vld [vmem:[%s0 + $0x30] sm:$0xf]
    %v68 = vld [vmem:[%s0 + $0x34] sm:$0xf]
    %v69 = vld [vmem:[%s0 + $0x38] sm:$0xf]
    %v70 = vld [vmem:[%s0 + $0x3c] sm:$0xf]
    %v71 = vld [vmem:[%s0 + $0x40] sm:$0xf]
    %v72 = vld [vmem:[%s0 + $0x44] sm:$0xf]
    %v73 = vld [vmem:[%s0 + $0x48] sm:$0xf]
    %v74 = vld [vmem:[%s0 + $0x4c] sm:$0xf]
    %v75 = vld [vmem:[%s0 + $0x50] sm:$0xf]
    %v76 = vld [vmem:[%s0 + $0x54] sm:$0xf]
    %v77 = vld [vmem:[%s0 + $0x58] sm:$0xf]
    %v78 = vld [vmem:[%s0 + $0x5c] sm:$0xf]
    %v79 = vld [vmem:[%s0 + $0x60] sm:$0xf]
    %v80 = vld [vmem:[%s0 + $0x64] sm:$0xf]
    %v81 = vld [vmem:[%s0 + $0x68] sm:$0xf]
    %v82 = vld [vmem:[%s0 + $0x6c] sm:$0xf]
    %v83 = vld [vmem:[%s0 + $0x70] sm:$0xf]
    %v84 = vld [vmem:[%s0 + $0x74] sm:$0xf]
    %v85 = vld [vmem:[%s0 + $0x78] sm:$0xf]
    %v86 = vld [vmem:[%s0 + $0x7c] sm:$0xf]
    %v87 = vld [vmem:[%s0 + $0x80] sm:$0xf]
    %v88 = vld [vmem:[%s0 + $0x84] sm:$0xf]
    %v89 = vld [vmem:[%s0 + $0x88] sm:$0xf]
    %v90 = vld [vmem:[%s0 + $0x8c] sm:$0xf]
    %v91 = vld [vmem:[%s0 + $0x90] sm:$0xf]
    %v92 = vld [vmem:[%s0 + $0x94] sm:$0xf]
    %v93 = vld [vmem:[%s0 + $0x98] sm:$0xf]
    %v94 = vld [vmem:[%s0 + $0x9c] sm:$0xf]
    %v95 = vld [vmem:[%s0 + $0xa0] sm:$0xf]
    %v96 = vld [vmem:[%s0 + $0xa4] sm:$0xf]
    %v97 = vld [vmem:[%s0 + $0xa8] sm:$0xf]
    %v98 = vld [vmem:[%s0 + $0xac] sm:$0xf]
    %v99 = vld [vmem:[%s0 + $0xb0] sm:$0xf]
    %v100 = vld [vmem:[%s0 + $0xb4] sm:$0xf]
    %v101 = vld [vmem:[%s0 + $0xb8] sm:$0xf]
    %v102 = vld [vmem:[%s0 + $0xbc] sm:$0xf]
    %v103 = vld [vmem:[%s0 + $0xc0] sm:$0xf]
    %v104 = vld [vmem:[%s0 + $0xc4] sm:$0xf]
    %v105 = vld [vmem:[%s0 + $0xc8] sm:$0xf]
    %v106 = vld [vmem:[%s0 + $0xcc] sm:$0xf]
    %v107 = vld [vmem:[%s0 + $0xd0] sm:$0xf]
    %v108 = vld [vmem:[%s0 + $0xd4] sm:$0xf]
    %v109 = vld [vmem:[%s0 + $0xd8] sm:$0xf]
    %v110 = vld [vmem:[%s0 + $0xdc] sm:$0xf]
    %v111 = vld [vmem:[%s0 + $0xe0] sm:$0x1]
    %v112 = vld [vmem:[%s2] sm:$0xf]
    %v113 = vld [vmem:[%s2 + $0x4] sm:$0xf]
    %v114 = vld [vmem:[%s3] sm:$0x1]
    %v116 = vlaneseq
    %v117 = vshrl.u32 %v116, 7
    %v118 = vsub.s32 0, %v117
    %v119 = vrot.slane %v114, %v118
    %v178 = vunpack.c.l.b16 %v55
    %v179 = vunpack.c.l.b16 %v56
    %v180 = vunpack.c.l.b16 %v57
    %v181 = vunpack.c.l.b16 %v58
    %v182 = vunpack.c.l.b16 %v59
    %v183 = vunpack.c.l.b16 %v60
    %v184 = vunpack.c.l.b16 %v61
    %v185 = vunpack.c.l.b16 %v62
    %v186 = vunpack.c.l.b16 %v63
    %v187 = vunpack.c.l.b16 %v64
    %v188 = vunpack.c.l.b16 %v65
    %v189 = vunpack.c.l.b16 %v66
    %v190 = vunpack.c.l.b16 %v67
    %v191 = vunpack.c.l.b16 %v68
    %v192 = vunpack.c.l.b16 %v69
    %v193 = vunpack.c.l.b16 %v70
    %v194 = vunpack.c.l.b16 %v71
    %v195 = vunpack.c.l.b16 %v72
    %v196 = vunpack.c.l.b16 %v73
    %v197 = vunpack.c.l.b16 %v74
    %v198 = vunpack.c.l.b16 %v75
    %v199 = vunpack.c.l.b16 %v76
    %v200 = vunpack.c.l.b16 %v77
    %v201 = vunpack.c.l.b16 %v78
    %v202 = vunpack.c.l.b16 %v79
    %v203 = vunpack.c.l.b16 %v80
    %v204 = vunpack.c.l.b16 %v81
    %v205 = vunpack.c.l.b16 %v82
    %v206 = vunpack.c.l.b16 %v83
    %v207 = vunpack.c.l.b16 %v84
    %v208 = vunpack.c.l.b16 %v85
    %v209 = vunpack.c.l.b16 %v86
    %v210 = vunpack.c.l.b16 %v87
    %v211 = vunpack.c.l.b16 %v88
    %v212 = vunpack.c.l.b16 %v89
    %v213 = vunpack.c.l.b16 %v90
    %v214 = vunpack.c.l.b16 %v91
    %v215 = vunpack.c.l.b16 %v92
    %v216 = vunpack.c.l.b16 %v93
    %v217 = vunpack.c.l.b16 %v94
    %v218 = vunpack.c.l.b16 %v95
    %v219 = vunpack.c.l.b16 %v96
    %v220 = vunpack.c.l.b16 %v97
    %v221 = vunpack.c.l.b16 %v98
    %v222 = vunpack.c.l.b16 %v99
    %v223 = vunpack.c.l.b16 %v100
    %v224 = vunpack.c.l.b16 %v101
    %v225 = vunpack.c.l.b16 %v102
    %v226 = vunpack.c.l.b16 %v103
    %v227 = vunpack.c.l.b16 %v104
    %v228 = vunpack.c.l.b16 %v105
    %v229 = vunpack.c.l.b16 %v106
    %v230 = vunpack.c.l.b16 %v107
    %v231 = vunpack.c.l.b16 %v108
    %v232 = vunpack.c.l.b16 %v109
    %v233 = vunpack.c.l.b16 %v110
    %v234 = vunpack.c.l.b16 %v111
    %v235 = vpack.c.b16 %v179, %v178
    %v236 = vpack.c.b16 %v181, %v180
    %v237 = vpack.c.b16 %v183, %v182
    %v238 = vpack.c.b16 %v185, %v184
    %v239 = vpack.c.b16 %v187, %v186
    %v240 = vpack.c.b16 %v189, %v188
    %v241 = vpack.c.b16 %v191, %v190
    %v242 = vpack.c.b16 %v193, %v192
    %v243 = vpack.c.b16 %v195, %v194
    %v244 = vpack.c.b16 %v197, %v196
    %v245 = vpack.c.b16 %v199, %v198
    %v246 = vpack.c.b16 %v201, %v200
    %v247 = vpack.c.b16 %v203, %v202
    %v248 = vpack.c.b16 %v205, %v204
    %v249 = vpack.c.b16 %v207, %v206
    %v250 = vpack.c.b16 %v209, %v208
    %v251 = vpack.c.b16 %v211, %v210
    %v252 = vpack.c.b16 %v213, %v212
    %v253 = vpack.c.b16 %v215, %v214
    %v254 = vpack.c.b16 %v217, %v216
    %v255 = vpack.c.b16 %v219, %v218
    %v256 = vpack.c.b16 %v221, %v220
    %v257 = vpack.c.b16 %v223, %v222
    %v258 = vpack.c.b16 %v225, %v224
    %v259 = vpack.c.b16 %v227, %v226
    %v260 = vpack.c.b16 %v229, %v228
    %v261 = vpack.c.b16 %v231, %v230
    %v262 = vpack.c.b16 %v233, %v232
    %v263 = vpack.c.b16 %v234, %v234
    %v266 = vunpack.c.l.b16 %v112
    %v267 = vunpack.c.l.b16 %v113
    %v268 = vpack.c.b16 %v267, %v266
    %vm270 = vcmask 130048
    %v272 = vsel %vm270, %v235, 0
    %v275 = vsel %vm270, %v236, 0
    %v278 = vsel %vm270, %v237, 0
    %v281 = vsel %vm270, %v238, 0
    %v284 = vsel %vm270, %v239, 0
    %v287 = vsel %vm270, %v240, 0
    %v290 = vsel %vm270, %v241, 0
    %v293 = vsel %vm270, %v242, 0
    %v296 = vsel %vm270, %v243, 0
    %v299 = vsel %vm270, %v244, 0
    %v302 = vsel %vm270, %v245, 0
    %v305 = vsel %vm270, %v246, 0
    %v308 = vsel %vm270, %v247, 0
    %v311 = vsel %vm270, %v248, 0
    %v314 = vsel %vm270, %v249, 0
    %v317 = vsel %vm270, %v250, 0
    %v320 = vsel %vm270, %v251, 0
    %v323 = vsel %vm270, %v252, 0
    %v326 = vsel %vm270, %v253, 0
    %v329 = vsel %vm270, %v254, 0
    %v332 = vsel %vm270, %v255, 0
    %v335 = vsel %vm270, %v256, 0
    %v338 = vsel %vm270, %v257, 0
    %v341 = vsel %vm270, %v258, 0
    %v344 = vsel %vm270, %v259, 0
    %v347 = vsel %vm270, %v260, 0
    %v350 = vsel %vm270, %v261, 0
    %v353 = vsel %vm270, %v262, 0
    %v356 = vsel %vm270, %v263, 0
    %358 = vmatprep.subr.bf16.mxu0 0
    %359 = vmatpush1.bf16.msra.mxu0 0
    %360 = vmatprep.subr.bf16.mxu0 0
    %361 = vmatpush1.bf16.msra.mxu0 0
    %362 = vmatprep.subr.bf16.mxu0 0
    %363 = vmatpush1.bf16.msra.mxu0 0
    %364 = vmatprep.subr.bf16.mxu0 0
    %365 = vmatpush1.bf16.msra.mxu0 0
    %366 = vmatprep.subr.bf16.mxu0 0
    %367 = vmatpush1.bf16.msra.mxu0 0
    %368 = vmatprep.subr.bf16.mxu0 0
    %369 = vmatpush1.bf16.msra.mxu0 0
    %370 = vmatprep.subr.bf16.mxu0 0
    %371 = vmatpush1.bf16.msra.mxu0 0
    %372 = vmatprep.subr.bf16.mxu0 0
    %373 = vmatpush1.bf16.msra.mxu0 %v268
    %374 = vmatprep.subr.bf16.mxu0 0
    %375 = vmatpush2.bf16.msra.mxu0 0
    %376 = vmatprep.subr.bf16.mxu0 0
    %377 = vmatpush2.bf16.msra.mxu0 0
    %378 = vmatprep.subr.bf16.mxu0 0
    %379 = vmatpush2.bf16.msra.mxu0 0
    %380 = vmatprep.subr.bf16.mxu0 0
    %381 = vmatpush2.bf16.msra.mxu0 0
    %382 = vmatprep.subr.bf16.mxu0 0
    %383 = vmatpush2.bf16.msra.mxu0 0
    %384 = vmatprep.subr.bf16.mxu0 0
    %385 = vmatpush2.bf16.msra.mxu0 0
    %386 = vmatprep.subr.bf16.mxu0 0
    %387 = vmatpush2.bf16.msra.mxu0 0
    %388 = vmatprep.subr.bf16.mxu0 0
    %389 = vmatpush2.bf16.msra.mxu0 0
    %390 = vmatprep.mubr.bf16.mxu0 0
    %391 = vmatmul.mubr.bf16.gmra.mxu0 %v272
    %v392 = vpop.f32.mrf.mxu0
    %v393 = vadd.f32 %v119, %v392
    %v394 = vpop.f32.mrf.mxu0
    %v395 = vpop.f32.mrf.mxu0
    %v396 = vadd.f32 %v119, %v395
    %v397 = vpop.f32.mrf.mxu0
    %398 = vmatprep.mubr.bf16.mxu0 0
    %399 = vmatmul.mubr.bf16.gmra.mxu0 %v275
    %v400 = vpop.f32.mrf.mxu0
    %v401 = vadd.f32 %v119, %v400
    %v402 = vpop.f32.mrf.mxu0
    %v403 = vpop.f32.mrf.mxu0
    %v404 = vadd.f32 %v119, %v403
    %v405 = vpop.f32.mrf.mxu0
    %406 = vmatprep.mubr.bf16.mxu0 0
    %407 = vmatmul.mubr.bf16.gmra.mxu0 %v278
    %v408 = vpop.f32.mrf.mxu0
    %v409 = vadd.f32 %v119, %v408
    %v410 = vpop.f32.mrf.mxu0
    %v411 = vpop.f32.mrf.mxu0
    %v412 = vadd.f32 %v119, %v411
    %v413 = vpop.f32.mrf.mxu0
    %414 = vmatprep.mubr.bf16.mxu0 0
    %415 = vmatmul.mubr.bf16.gmra.mxu0 %v281
    %v416 = vpop.f32.mrf.mxu0
    %v417 = vadd.f32 %v119, %v416
    %v418 = vpop.f32.mrf.mxu0
    %v419 = vpop.f32.mrf.mxu0
    %v420 = vadd.f32 %v119, %v419
    %v421 = vpop.f32.mrf.mxu0
    %422 = vmatprep.mubr.bf16.mxu0 0
    %423 = vmatmul.mubr.bf16.gmra.mxu0 %v284
    %v424 = vpop.f32.mrf.mxu0
    %v425 = vadd.f32 %v119, %v424
    %v426 = vpop.f32.mrf.mxu0
    %v427 = vpop.f32.mrf.mxu0
    %v428 = vadd.f32 %v119, %v427
    %v429 = vpop.f32.mrf.mxu0
    %430 = vmatprep.mubr.bf16.mxu0 0
    %431 = vmatmul.mubr.bf16.gmra.mxu0 %v287
    %v432 = vpop.f32.mrf.mxu0
    %v433 = vadd.f32 %v119, %v432
    %v434 = vpop.f32.mrf.mxu0
    %v435 = vpop.f32.mrf.mxu0
    %v436 = vadd.f32 %v119, %v435
    %v437 = vpop.f32.mrf.mxu0
    %438 = vmatprep.mubr.bf16.mxu0 0
    %439 = vmatmul.mubr.bf16.gmra.mxu0 %v290
    %v440 = vpop.f32.mrf.mxu0
    %v441 = vadd.f32 %v119, %v440
    %v442 = vpop.f32.mrf.mxu0
    %v443 = vpop.f32.mrf.mxu0
    %v444 = vadd.f32 %v119, %v443
    %v445 = vpop.f32.mrf.mxu0
    %446 = vmatprep.mubr.bf16.mxu0 0
    %447 = vmatmul.mubr.bf16.gmra.mxu0 %v293
    %v448 = vpop.f32.mrf.mxu0
    %v449 = vadd.f32 %v119, %v448
    %v450 = vpop.f32.mrf.mxu0
    %v451 = vpop.f32.mrf.mxu0
    %v452 = vadd.f32 %v119, %v451
    %v453 = vpop.f32.mrf.mxu0
    %454 = vmatprep.mubr.bf16.mxu0 0
    %455 = vmatmul.mubr.bf16.gmra.mxu0 %v296
    %v456 = vpop.f32.mrf.mxu0
    %v457 = vadd.f32 %v119, %v456
    %v458 = vpop.f32.mrf.mxu0
    %v459 = vpop.f32.mrf.mxu0
    %v460 = vadd.f32 %v119, %v459
    %v461 = vpop.f32.mrf.mxu0
    %462 = vmatprep.mubr.bf16.mxu0 0
    %463 = vmatmul.mubr.bf16.gmra.mxu0 %v299
    %v464 = vpop.f32.mrf.mxu0
    %v465 = vadd.f32 %v119, %v464
    %v466 = vpop.f32.mrf.mxu0
    %v467 = vpop.f32.mrf.mxu0
    %v468 = vadd.f32 %v119, %v467
    %v469 = vpop.f32.mrf.mxu0
    %470 = vmatprep.mubr.bf16.mxu0 0
    %471 = vmatmul.mubr.bf16.gmra.mxu0 %v302
    %v472 = vpop.f32.mrf.mxu0
    %v473 = vadd.f32 %v119, %v472
    %v474 = vpop.f32.mrf.mxu0
    %v475 = vpop.f32.mrf.mxu0
    %v476 = vadd.f32 %v119, %v475
    %v477 = vpop.f32.mrf.mxu0
    %478 = vmatprep.mubr.bf16.mxu0 0
    %479 = vmatmul.mubr.bf16.gmra.mxu0 %v305
    %v480 = vpop.f32.mrf.mxu0
    %v481 = vadd.f32 %v119, %v480
    %v482 = vpop.f32.mrf.mxu0
    %v483 = vpop.f32.mrf.mxu0
    %v484 = vadd.f32 %v119, %v483
    %v485 = vpop.f32.mrf.mxu0
    %486 = vmatprep.mubr.bf16.mxu0 0
    %487 = vmatmul.mubr.bf16.gmra.mxu0 %v308
    %v488 = vpop.f32.mrf.mxu0
    %v489 = vadd.f32 %v119, %v488
    %v490 = vpop.f32.mrf.mxu0
    %v491 = vpop.f32.mrf.mxu0
    %v492 = vadd.f32 %v119, %v491
    %v493 = vpop.f32.mrf.mxu0
    %494 = vmatprep.mubr.bf16.mxu0 0
    %495 = vmatmul.mubr.bf16.gmra.mxu0 %v311
    %v496 = vpop.f32.mrf.mxu0
    %v497 = vadd.f32 %v119, %v496
    %v498 = vpop.f32.mrf.mxu0
    %v499 = vpop.f32.mrf.mxu0
    %v500 = vadd.f32 %v119, %v499
    %v501 = vpop.f32.mrf.mxu0
    %502 = vmatprep.mubr.bf16.mxu0 0
    %503 = vmatmul.mubr.bf16.gmra.mxu0 %v314
    %v504 = vpop.f32.mrf.mxu0
    %v505 = vadd.f32 %v119, %v504
    %v506 = vpop.f32.mrf.mxu0
    %v507 = vpop.f32.mrf.mxu0
    %v508 = vadd.f32 %v119, %v507
    %v509 = vpop.f32.mrf.mxu0
    %510 = vmatprep.mubr.bf16.mxu0 0
    %511 = vmatmul.mubr.bf16.gmra.mxu0 %v317
    %v512 = vpop.f32.mrf.mxu0
    %v513 = vadd.f32 %v119, %v512
    %v514 = vpop.f32.mrf.mxu0
    %v515 = vpop.f32.mrf.mxu0
    %v516 = vadd.f32 %v119, %v515
    %v517 = vpop.f32.mrf.mxu0
    %518 = vmatprep.mubr.bf16.mxu0 0
    %519 = vmatmul.mubr.bf16.gmra.mxu0 %v320
    %v520 = vpop.f32.mrf.mxu0
    %v521 = vadd.f32 %v119, %v520
    %v522 = vpop.f32.mrf.mxu0
    %v523 = vpop.f32.mrf.mxu0
    %v524 = vadd.f32 %v119, %v523
    %v525 = vpop.f32.mrf.mxu0
    %526 = vmatprep.mubr.bf16.mxu0 0
    %527 = vmatmul.mubr.bf16.gmra.mxu0 %v323
    %v528 = vpop.f32.mrf.mxu0
    %v529 = vadd.f32 %v119, %v528
    %v530 = vpop.f32.mrf.mxu0
    %v531 = vpop.f32.mrf.mxu0
    %v532 = vadd.f32 %v119, %v531
    %v533 = vpop.f32.mrf.mxu0
    %534 = vmatprep.mubr.bf16.mxu0 0
    %535 = vmatmul.mubr.bf16.gmra.mxu0 %v326
    %v536 = vpop.f32.mrf.mxu0
    %v537 = vadd.f32 %v119, %v536
    %v538 = vpop.f32.mrf.mxu0
    %v539 = vpop.f32.mrf.mxu0
    %v540 = vadd.f32 %v119, %v539
    %v541 = vpop.f32.mrf.mxu0
    %542 = vmatprep.mubr.bf16.mxu0 0
    %543 = vmatmul.mubr.bf16.gmra.mxu0 %v329
    %v544 = vpop.f32.mrf.mxu0
    %v545 = vadd.f32 %v119, %v544
    %v546 = vpop.f32.mrf.mxu0
    %v547 = vpop.f32.mrf.mxu0
    %v548 = vadd.f32 %v119, %v547
    %v549 = vpop.f32.mrf.mxu0
    %550 = vmatprep.mubr.bf16.mxu0 0
    %551 = vmatmul.mubr.bf16.gmra.mxu0 %v332
    %v552 = vpop.f32.mrf.mxu0
    %v553 = vadd.f32 %v119, %v552
    %v554 = vpop.f32.mrf.mxu0
    %v555 = vpop.f32.mrf.mxu0
    %v556 = vadd.f32 %v119, %v555
    %v557 = vpop.f32.mrf.mxu0
    %558 = vmatprep.mubr.bf16.mxu0 0
    %559 = vmatmul.mubr.bf16.gmra.mxu0 %v335
    %v560 = vpop.f32.mrf.mxu0
    %v561 = vadd.f32 %v119, %v560
    %v562 = vpop.f32.mrf.mxu0
    %v563 = vpop.f32.mrf.mxu0
    %v564 = vadd.f32 %v119, %v563
    %v565 = vpop.f32.mrf.mxu0
    %566 = vmatprep.mubr.bf16.mxu0 0
    %567 = vmatmul.mubr.bf16.gmra.mxu0 %v338
    %v568 = vpop.f32.mrf.mxu0
    %v569 = vadd.f32 %v119, %v568
    %v570 = vpop.f32.mrf.mxu0
    %v571 = vpop.f32.mrf.mxu0
    %v572 = vadd.f32 %v119, %v571
    %v573 = vpop.f32.mrf.mxu0
    %574 = vmatprep.mubr.bf16.mxu0 0
    %575 = vmatmul.mubr.bf16.gmra.mxu0 %v341
    %v576 = vpop.f32.mrf.mxu0
    %v577 = vadd.f32 %v119, %v576
    %v578 = vpop.f32.mrf.mxu0
    %v579 = vpop.f32.mrf.mxu0
    %v580 = vadd.f32 %v119, %v579
    %v581 = vpop.f32.mrf.mxu0
    %582 = vmatprep.mubr.bf16.mxu0 0
    %583 = vmatmul.mubr.bf16.gmra.mxu0 %v344
    %v584 = vpop.f32.mrf.mxu0
    %v585 = vadd.f32 %v119, %v584
    %v586 = vpop.f32.mrf.mxu0
    %v587 = vpop.f32.mrf.mxu0
    %v588 = vadd.f32 %v119, %v587
    %v589 = vpop.f32.mrf.mxu0
    %590 = vmatprep.mubr.bf16.mxu0 0
    %591 = vmatmul.mubr.bf16.gmra.mxu0 %v347
    %v592 = vpop.f32.mrf.mxu0
    %v593 = vadd.f32 %v119, %v592
    %v594 = vpop.f32.mrf.mxu0
    %v595 = vpop.f32.mrf.mxu0
    %v596 = vadd.f32 %v119, %v595
    %v597 = vpop.f32.mrf.mxu0
    %598 = vmatprep.mubr.bf16.mxu0 0
    %599 = vmatmul.mubr.bf16.gmra.mxu0 %v350
    %v600 = vpop.f32.mrf.mxu0
    %v601 = vadd.f32 %v119, %v600
    %v602 = vpop.f32.mrf.mxu0
    %v603 = vpop.f32.mrf.mxu0
    %v604 = vadd.f32 %v119, %v603
    %v605 = vpop.f32.mrf.mxu0
    %606 = vmatprep.mubr.bf16.mxu0 0
    %607 = vmatmul.mubr.bf16.gmra.mxu0 %v353
    %v608 = vpop.f32.mrf.mxu0
    %v609 = vadd.f32 %v119, %v608
    %v610 = vpop.f32.mrf.mxu0
    %v611 = vpop.f32.mrf.mxu0
    %v612 = vadd.f32 %v119, %v611
    %v613 = vpop.f32.mrf.mxu0
    %614 = vmatprep.mubr.bf16.mxu0 0
    %615 = vmatmul.mubr.bf16.gmra.mxu0 %v356
    %v616 = vpop.f32.mrf.mxu0
    %v617 = vadd.f32 %v119, %v616
    %v618 = vpop.f32.mrf.mxu0
    %v619 = vpop.f32.mrf.mxu0
    %v620 = vpop.f32.mrf.mxu0
    %621 = vdwg.mxu0
    %vm622 = vcmp.ge.f32.partialorder %v393, 0.0
    %vm623 = vcmp.ge.f32.partialorder %v396, 0.0
    %vm624 = vcmp.ge.f32.partialorder %v401, 0.0
    %vm625 = vcmp.ge.f32.partialorder %v404, 0.0
    %vm626 = vcmp.ge.f32.partialorder %v409, 0.0
    %vm627 = vcmp.ge.f32.partialorder %v412, 0.0
    %vm628 = vcmp.ge.f32.partialorder %v417, 0.0
    %vm629 = vcmp.ge.f32.partialorder %v420, 0.0
    %vm630 = vcmp.ge.f32.partialorder %v425, 0.0
    %vm631 = vcmp.ge.f32.partialorder %v428, 0.0
    %vm632 = vcmp.ge.f32.partialorder %v433, 0.0
    %vm633 = vcmp.ge.f32.partialorder %v436, 0.0
    %vm634 = vcmp.ge.f32.partialorder %v441, 0.0
    %vm635 = vcmp.ge.f32.partialorder %v444, 0.0
    %vm636 = vcmp.ge.f32.partialorder %v449, 0.0
    %vm637 = vcmp.ge.f32.partialorder %v452, 0.0
    %vm638 = vcmp.ge.f32.partialorder %v457, 0.0
    %vm639 = vcmp.ge.f32.partialorder %v460, 0.0
    %vm640 = vcmp.ge.f32.partialorder %v465, 0.0
    %vm641 = vcmp.ge.f32.partialorder %v468, 0.0
    %vm642 = vcmp.ge.f32.partialorder %v473, 0.0
    %vm643 = vcmp.ge.f32.partialorder %v476, 0.0
    %vm644 = vcmp.ge.f32.partialorder %v481, 0.0
    %vm645 = vcmp.ge.f32.partialorder %v484, 0.0
    %vm646 = vcmp.ge.f32.partialorder %v489, 0.0
    %vm647 = vcmp.ge.f32.partialorder %v492, 0.0
    %vm648 = vcmp.ge.f32.partialorder %v497, 0.0
    %vm649 = vcmp.ge.f32.partialorder %v500, 0.0
    %vm650 = vcmp.ge.f32.partialorder %v505, 0.0
    %vm651 = vcmp.ge.f32.partialorder %v508, 0.0
    %vm652 = vcmp.ge.f32.partialorder %v513, 0.0
    %vm653 = vcmp.ge.f32.partialorder %v516, 0.0
    %vm654 = vcmp.ge.f32.partialorder %v521, 0.0
    %vm655 = vcmp.ge.f32.partialorder %v524, 0.0
    %vm656 = vcmp.ge.f32.partialorder %v529, 0.0
    %vm657 = vcmp.ge.f32.partialorder %v532, 0.0
    %vm658 = vcmp.ge.f32.partialorder %v537, 0.0
    %vm659 = vcmp.ge.f32.partialorder %v540, 0.0
    %vm660 = vcmp.ge.f32.partialorder %v545, 0.0
    %vm661 = vcmp.ge.f32.partialorder %v548, 0.0
    %vm662 = vcmp.ge.f32.partialorder %v553, 0.0
    %vm663 = vcmp.ge.f32.partialorder %v556, 0.0
    %vm664 = vcmp.ge.f32.partialorder %v561, 0.0
    %vm665 = vcmp.ge.f32.partialorder %v564, 0.0
    %vm666 = vcmp.ge.f32.partialorder %v569, 0.0
    %vm667 = vcmp.ge.f32.partialorder %v572, 0.0
    %vm668 = vcmp.ge.f32.partialorder %v577, 0.0
    %vm669 = vcmp.ge.f32.partialorder %v580, 0.0
    %vm670 = vcmp.ge.f32.partialorder %v585, 0.0
    %vm671 = vcmp.ge.f32.partialorder %v588, 0.0
    %vm672 = vcmp.ge.f32.partialorder %v593, 0.0
    %vm673 = vcmp.ge.f32.partialorder %v596, 0.0
    %vm674 = vcmp.ge.f32.partialorder %v601, 0.0
    %vm675 = vcmp.ge.f32.partialorder %v604, 0.0
    %vm676 = vcmp.ge.f32.partialorder %v609, 0.0
    %vm677 = vcmp.ge.f32.partialorder %v612, 0.0
    %vm678 = vcmp.ge.f32.partialorder %v617, 0.0
    %v679 = vmul.f32 %v393, 0.01
    %v680 = vmul.f32 %v396, 0.01
    %v681 = vmul.f32 %v401, 0.01
    %v682 = vmul.f32 %v404, 0.01
    %v683 = vmul.f32 %v409, 0.01
    %v684 = vmul.f32 %v412, 0.01
    %v685 = vmul.f32 %v417, 0.01
    %v686 = vmul.f32 %v420, 0.01
    %v687 = vmul.f32 %v425, 0.01
    %v688 = vmul.f32 %v428, 0.01
    %v689 = vmul.f32 %v433, 0.01
    %v690 = vmul.f32 %v436, 0.01
    %v691 = vmul.f32 %v441, 0.01
    %v692 = vmul.f32 %v444, 0.01
    %v693 = vmul.f32 %v449, 0.01
    %v694 = vmul.f32 %v452, 0.01
    %v695 = vmul.f32 %v457, 0.01
    %v696 = vmul.f32 %v460, 0.01
    %v697 = vmul.f32 %v465, 0.01
    %v698 = vmul.f32 %v468, 0.01
    %v699 = vmul.f32 %v473, 0.01
    %v700 = vmul.f32 %v476, 0.01
    %v701 = vmul.f32 %v481, 0.01
    %v702 = vmul.f32 %v484, 0.01
    %v703 = vmul.f32 %v489, 0.01
    %v704 = vmul.f32 %v492, 0.01
    %v705 = vmul.f32 %v497, 0.01
    %v706 = vmul.f32 %v500, 0.01
    %v707 = vmul.f32 %v505, 0.01
    %v708 = vmul.f32 %v508, 0.01
    %v709 = vmul.f32 %v513, 0.01
    %v710 = vmul.f32 %v516, 0.01
    %v711 = vmul.f32 %v521, 0.01
    %v712 = vmul.f32 %v524, 0.01
    %v713 = vmul.f32 %v529, 0.01
    %v714 = vmul.f32 %v532, 0.01
    %v715 = vmul.f32 %v537, 0.01
    %v716 = vmul.f32 %v540, 0.01
    %v717 = vmul.f32 %v545, 0.01
    %v718 = vmul.f32 %v548, 0.01
    %v719 = vmul.f32 %v553, 0.01
    %v720 = vmul.f32 %v556, 0.01
    %v721 = vmul.f32 %v561, 0.01
    %v722 = vmul.f32 %v564, 0.01
    %v723 = vmul.f32 %v569, 0.01
    %v724 = vmul.f32 %v572, 0.01
    %v725 = vmul.f32 %v577, 0.01
    %v726 = vmul.f32 %v580, 0.01
    %v727 = vmul.f32 %v585, 0.01
    %v728 = vmul.f32 %v588, 0.01
    %v729 = vmul.f32 %v593, 0.01
    %v730 = vmul.f32 %v596, 0.01
    %v731 = vmul.f32 %v601, 0.01
    %v732 = vmul.f32 %v604, 0.01
    %v733 = vmul.f32 %v609, 0.01
    %v734 = vmul.f32 %v612, 0.01
    %v735 = vmul.f32 %v617, 0.01
    %v736 = vsel %vm622, %v393, %v679
    %v737 = vsel %vm623, %v396, %v680
    %v738 = vsel %vm624, %v401, %v681
    %v739 = vsel %vm625, %v404, %v682
    %v740 = vsel %vm626, %v409, %v683
    %v741 = vsel %vm627, %v412, %v684
    %v742 = vsel %vm628, %v417, %v685
    %v743 = vsel %vm629, %v420, %v686
    %v744 = vsel %vm630, %v425, %v687
    %v745 = vsel %vm631, %v428, %v688
    %v746 = vsel %vm632, %v433, %v689
    %v747 = vsel %vm633, %v436, %v690
    %v748 = vsel %vm634, %v441, %v691
    %v749 = vsel %vm635, %v444, %v692
    %v750 = vsel %vm636, %v449, %v693
    %v751 = vsel %vm637, %v452, %v694
    %v752 = vsel %vm638, %v457, %v695
    %v753 = vsel %vm639, %v460, %v696
    %v754 = vsel %vm640, %v465, %v697
    %v755 = vsel %vm641, %v468, %v698
    %v756 = vsel %vm642, %v473, %v699
    %v757 = vsel %vm643, %v476, %v700
    %v758 = vsel %vm644, %v481, %v701
    %v759 = vsel %vm645, %v484, %v702
    %v760 = vsel %vm646, %v489, %v703
    %v761 = vsel %vm647, %v492, %v704
    %v762 = vsel %vm648, %v497, %v705
    %v763 = vsel %vm649, %v500, %v706
    %v764 = vsel %vm650, %v505, %v707
    %v765 = vsel %vm651, %v508, %v708
    %v766 = vsel %vm652, %v513, %v709
    %v767 = vsel %vm653, %v516, %v710
    %v768 = vsel %vm654, %v521, %v711
    %v769 = vsel %vm655, %v524, %v712
    %v770 = vsel %vm656, %v529, %v713
    %v771 = vsel %vm657, %v532, %v714
    %v772 = vsel %vm658, %v537, %v715
    %v773 = vsel %vm659, %v540, %v716
    %v774 = vsel %vm660, %v545, %v717
    %v775 = vsel %vm661, %v548, %v718
    %v776 = vsel %vm662, %v553, %v719
    %v777 = vsel %vm663, %v556, %v720
    %v778 = vsel %vm664, %v561, %v721
    %v779 = vsel %vm665, %v564, %v722
    %v780 = vsel %vm666, %v569, %v723
    %v781 = vsel %vm667, %v572, %v724
    %v782 = vsel %vm668, %v577, %v725
    %v783 = vsel %vm669, %v580, %v726
    %v784 = vsel %vm670, %v585, %v727
    %v785 = vsel %vm671, %v588, %v728
    %v786 = vsel %vm672, %v593, %v729
    %v787 = vsel %vm673, %v596, %v730
    %v788 = vsel %vm674, %v601, %v731
    %v789 = vsel %vm675, %v604, %v732
    %v790 = vsel %vm676, %v609, %v733
    %v791 = vsel %vm677, %v612, %v734
    %v792 = vsel %vm678, %v617, %v735
    %vm793 = vcmask 523264
    %v794 = vsel %vm793, %v736, 0.0
    %v795 = vsel %vm793, %v737, 0.0
    %v796 = vadd.f32 %v794, %v795
    %v797 = vsel %vm793, %v738, 0.0
    %v798 = vadd.f32 %v796, %v797
    %v799 = vsel %vm793, %v739, 0.0
    %v800 = vadd.f32 %v798, %v799
    %v801 = vsel %vm793, %v740, 0.0
    %v802 = vadd.f32 %v800, %v801
    %v803 = vsel %vm793, %v741, 0.0
    %v804 = vadd.f32 %v802, %v803
    %v805 = vsel %vm793, %v742, 0.0
    %v806 = vadd.f32 %v804, %v805
    %v807 = vsel %vm793, %v743, 0.0
    %v808 = vadd.f32 %v806, %v807
    %v809 = vsel %vm793, %v744, 0.0
    %v810 = vadd.f32 %v808, %v809
    %v811 = vsel %vm793, %v745, 0.0
    %v812 = vadd.f32 %v810, %v811
    %v813 = vsel %vm793, %v746, 0.0
    %v814 = vadd.f32 %v812, %v813
    %v815 = vsel %vm793, %v747, 0.0
    %v816 = vadd.f32 %v814, %v815
    %v817 = vsel %vm793, %v748, 0.0
    %v818 = vadd.f32 %v816, %v817
    %v819 = vsel %vm793, %v749, 0.0
    %v820 = vadd.f32 %v818, %v819
    %v821 = vsel %vm793, %v750, 0.0
    %v822 = vadd.f32 %v820, %v821
    %v823 = vsel %vm793, %v751, 0.0
    %v824 = vadd.f32 %v822, %v823
    %v825 = vsel %vm793, %v752, 0.0
    %v826 = vadd.f32 %v824, %v825
    %v827 = vsel %vm793, %v753, 0.0
    %v828 = vadd.f32 %v826, %v827
    %v829 = vsel %vm793, %v754, 0.0
    %v830 = vadd.f32 %v828, %v829
    %v831 = vsel %vm793, %v755, 0.0
    %v832 = vadd.f32 %v830, %v831
    %v833 = vsel %vm793, %v756, 0.0
    %v834 = vadd.f32 %v832, %v833
    %v835 = vsel %vm793, %v757, 0.0
    %v836 = vadd.f32 %v834, %v835
    %v837 = vsel %vm793, %v758, 0.0
    %v838 = vadd.f32 %v836, %v837
    %v839 = vsel %vm793, %v759, 0.0
    %v840 = vadd.f32 %v838, %v839
    %v841 = vsel %vm793, %v760, 0.0
    %v842 = vadd.f32 %v840, %v841
    %v843 = vsel %vm793, %v761, 0.0
    %v844 = vadd.f32 %v842, %v843
    %v845 = vsel %vm793, %v762, 0.0
    %v846 = vadd.f32 %v844, %v845
    %v847 = vsel %vm793, %v763, 0.0
    %v848 = vadd.f32 %v846, %v847
    %v849 = vsel %vm793, %v764, 0.0
    %v850 = vadd.f32 %v848, %v849
    %v851 = vsel %vm793, %v765, 0.0
    %v852 = vadd.f32 %v850, %v851
    %v853 = vsel %vm793, %v766, 0.0
    %v854 = vadd.f32 %v852, %v853
    %v855 = vsel %vm793, %v767, 0.0
    %v856 = vadd.f32 %v854, %v855
    %v857 = vsel %vm793, %v768, 0.0
    %v858 = vadd.f32 %v856, %v857
    %v859 = vsel %vm793, %v769, 0.0
    %v860 = vadd.f32 %v858, %v859
    %v861 = vsel %vm793, %v770, 0.0
    %v862 = vadd.f32 %v860, %v861
    %v863 = vsel %vm793, %v771, 0.0
    %v864 = vadd.f32 %v862, %v863
    %v865 = vsel %vm793, %v772, 0.0
    %v866 = vadd.f32 %v864, %v865
    %v867 = vsel %vm793, %v773, 0.0
    %v868 = vadd.f32 %v866, %v867
    %v869 = vsel %vm793, %v774, 0.0
    %v870 = vadd.f32 %v868, %v869
    %v871 = vsel %vm793, %v775, 0.0
    %v872 = vadd.f32 %v870, %v871
    %v873 = vsel %vm793, %v776, 0.0
    %v874 = vadd.f32 %v872, %v873
    %v875 = vsel %vm793, %v777, 0.0
    %v876 = vadd.f32 %v874, %v875
    %v877 = vsel %vm793, %v778, 0.0
    %v878 = vadd.f32 %v876, %v877
    %v879 = vsel %vm793, %v779, 0.0
    %v880 = vadd.f32 %v878, %v879
    %v881 = vsel %vm793, %v780, 0.0
    %v882 = vadd.f32 %v880, %v881
    %v883 = vsel %vm793, %v781, 0.0
    %v884 = vadd.f32 %v882, %v883
    %v885 = vsel %vm793, %v782, 0.0
    %v886 = vadd.f32 %v884, %v885
    %v887 = vsel %vm793, %v783, 0.0
    %v888 = vadd.f32 %v886, %v887
    %v889 = vsel %vm793, %v784, 0.0
    %v890 = vadd.f32 %v888, %v889
    %v891 = vsel %vm793, %v785, 0.0
    %v892 = vadd.f32 %v890, %v891
    %v893 = vsel %vm793, %v786, 0.0
    %v894 = vadd.f32 %v892, %v893
    %v895 = vsel %vm793, %v787, 0.0
    %v896 = vadd.f32 %v894, %v895
    %v897 = vsel %vm793, %v788, 0.0
    %v898 = vadd.f32 %v896, %v897
    %v899 = vsel %vm793, %v789, 0.0
    %v900 = vadd.f32 %v898, %v899
    %v901 = vsel %vm793, %v790, 0.0
    %v902 = vadd.f32 %v900, %v901
    %v903 = vsel %vm793, %v791, 0.0
    %v904 = vadd.f32 %v902, %v903
    %vm905 = vcmask 517120
    %v906 = vsel %vm905, %v792, 0.0
    %v907 = vadd.f32 %v904, %v906
    %v908 = vrot.slane %v907, 4
    %v909 = vadd.f32 %v907, %v908
    %v910 = vrot.slane %v909, 2
    %v911 = vadd.f32 %v909, %v910
    %v912 = vrot.slane %v911, 1
    %v913 = vadd.f32 %v911, %v912
    %v914 = vmul.f32 %v736, %v736
    %v915 = vmul.f32 %v737, %v737
    %v916 = vmul.f32 %v738, %v738
    %v917 = vmul.f32 %v739, %v739
    %v918 = vmul.f32 %v740, %v740
    %v919 = vmul.f32 %v741, %v741
    %v920 = vmul.f32 %v742, %v742
    %v921 = vmul.f32 %v743, %v743
    %v922 = vmul.f32 %v744, %v744
    %v923 = vmul.f32 %v745, %v745
    %v924 = vmul.f32 %v746, %v746
    %v925 = vmul.f32 %v747, %v747
    %v926 = vmul.f32 %v748, %v748
    %v927 = vmul.f32 %v749, %v749
    %v928 = vmul.f32 %v750, %v750
    %v929 = vmul.f32 %v751, %v751
    %v930 = vmul.f32 %v752, %v752
    %v931 = vmul.f32 %v753, %v753
    %v932 = vmul.f32 %v754, %v754
    %v933 = vmul.f32 %v755, %v755
    %v934 = vmul.f32 %v756, %v756
    %v935 = vmul.f32 %v757, %v757
    %v936 = vmul.f32 %v758, %v758
    %v937 = vmul.f32 %v759, %v759
    %v938 = vmul.f32 %v760, %v760
    %v939 = vmul.f32 %v761, %v761
    %v940 = vmul.f32 %v762, %v762
    %v941 = vmul.f32 %v763, %v763
    %v942 = vmul.f32 %v764, %v764
    %v943 = vmul.f32 %v765, %v765
    %v944 = vmul.f32 %v766, %v766
    %v945 = vmul.f32 %v767, %v767
    %v946 = vmul.f32 %v768, %v768
    %v947 = vmul.f32 %v769, %v769
    %v948 = vmul.f32 %v770, %v770
    %v949 = vmul.f32 %v771, %v771
    %v950 = vmul.f32 %v772, %v772
    %v951 = vmul.f32 %v773, %v773
    %v952 = vmul.f32 %v774, %v774
    %v953 = vmul.f32 %v775, %v775
    %v954 = vmul.f32 %v776, %v776
    %v955 = vmul.f32 %v777, %v777
    %v956 = vmul.f32 %v778, %v778
    %v957 = vmul.f32 %v779, %v779
    %v958 = vmul.f32 %v780, %v780
    %v959 = vmul.f32 %v781, %v781
    %v960 = vmul.f32 %v782, %v782
    %v961 = vmul.f32 %v783, %v783
    %v962 = vmul.f32 %v784, %v784
    %v963 = vmul.f32 %v785, %v785
    %v964 = vmul.f32 %v786, %v786
    %v965 = vmul.f32 %v787, %v787
    %v966 = vmul.f32 %v788, %v788
    %v967 = vmul.f32 %v789, %v789
    %v968 = vmul.f32 %v790, %v790
    %v969 = vmul.f32 %v791, %v791
    %v970 = vmul.f32 %v792, %v792
    %v971 = vsel %vm793, %v914, 0.0
    %v972 = vsel %vm793, %v915, 0.0
    %v973 = vadd.f32 %v971, %v972
    %v974 = vsel %vm793, %v916, 0.0
    %v975 = vadd.f32 %v973, %v974
    %v976 = vsel %vm793, %v917, 0.0
    %v977 = vadd.f32 %v975, %v976
    %v978 = vsel %vm793, %v918, 0.0
    %v979 = vadd.f32 %v977, %v978
    %v980 = vsel %vm793, %v919, 0.0
    %v981 = vadd.f32 %v979, %v980
    %v982 = vsel %vm793, %v920, 0.0
    %v983 = vadd.f32 %v981, %v982
    %v984 = vsel %vm793, %v921, 0.0
    %v985 = vadd.f32 %v983, %v984
    %v986 = vsel %vm793, %v922, 0.0
    %v987 = vadd.f32 %v985, %v986
    %v988 = vsel %vm793, %v923, 0.0
    %v989 = vadd.f32 %v987, %v988
    %v990 = vsel %vm793, %v924, 0.0
    %v991 = vadd.f32 %v989, %v990
    %v992 = vsel %vm793, %v925, 0.0
    %v993 = vadd.f32 %v991, %v992
    %v994 = vsel %vm793, %v926, 0.0
    %v995 = vadd.f32 %v993, %v994
    %v996 = vsel %vm793, %v927, 0.0
    %v997 = vadd.f32 %v995, %v996
    %v998 = vsel %vm793, %v928, 0.0
    %v999 = vadd.f32 %v997, %v998
    %v1000 = vsel %vm793, %v929, 0.0
    %v1001 = vadd.f32 %v999, %v1000
    %v1002 = vsel %vm793, %v930, 0.0
    %v1003 = vadd.f32 %v1001, %v1002
    %v1004 = vsel %vm793, %v931, 0.0
    %v1005 = vadd.f32 %v1003, %v1004
    %v1006 = vsel %vm793, %v932, 0.0
    %v1007 = vadd.f32 %v1005, %v1006
    %v1008 = vsel %vm793, %v933, 0.0
    %v1009 = vadd.f32 %v1007, %v1008
    %v1010 = vsel %vm793, %v934, 0.0
    %v1011 = vadd.f32 %v1009, %v1010
    %v1012 = vsel %vm793, %v935, 0.0
    %v1013 = vadd.f32 %v1011, %v1012
    %v1014 = vsel %vm793, %v936, 0.0
    %v1015 = vadd.f32 %v1013, %v1014
    %v1016 = vsel %vm793, %v937, 0.0
    %v1017 = vadd.f32 %v1015, %v1016
    %v1018 = vsel %vm793, %v938, 0.0
    %v1019 = vadd.f32 %v1017, %v1018
    %v1020 = vsel %vm793, %v939, 0.0
    %v1021 = vadd.f32 %v1019, %v1020
    %v1022 = vsel %vm793, %v940, 0.0
    %v1023 = vadd.f32 %v1021, %v1022
    %v1024 = vsel %vm793, %v941, 0.0
    %v1025 = vadd.f32 %v1023, %v1024
    %v1026 = vsel %vm793, %v942, 0.0
    %v1027 = vadd.f32 %v1025, %v1026
    %v1028 = vsel %vm793, %v943, 0.0
    %v1029 = vadd.f32 %v1027, %v1028
    %v1030 = vsel %vm793, %v944, 0.0
    %v1031 = vadd.f32 %v1029, %v1030
    %v1032 = vsel %vm793, %v945, 0.0
    %v1033 = vadd.f32 %v1031, %v1032
    %v1034 = vsel %vm793, %v946, 0.0
    %v1035 = vadd.f32 %v1033, %v1034
    %v1036 = vsel %vm793, %v947, 0.0
    %v1037 = vadd.f32 %v1035, %v1036
    %v1038 = vsel %vm793, %v948, 0.0
    %v1039 = vadd.f32 %v1037, %v1038
    %v1040 = vsel %vm793, %v949, 0.0
    %v1041 = vadd.f32 %v1039, %v1040
    %v1042 = vsel %vm793, %v950, 0.0
    %v1043 = vadd.f32 %v1041, %v1042
    %v1044 = vsel %vm793, %v951, 0.0
    %v1045 = vadd.f32 %v1043, %v1044
    %v1046 = vsel %vm793, %v952, 0.0
    %v1047 = vadd.f32 %v1045, %v1046
    %v1048 = vsel %vm793, %v953, 0.0
    %v1049 = vadd.f32 %v1047, %v1048
    %v1050 = vsel %vm793, %v954, 0.0
    %v1051 = vadd.f32 %v1049, %v1050
    %v1052 = vsel %vm793, %v955, 0.0
    %v1053 = vadd.f32 %v1051, %v1052
    %v1054 = vsel %vm793, %v956, 0.0
    %v1055 = vadd.f32 %v1053, %v1054
    %v1056 = vsel %vm793, %v957, 0.0
    %v1057 = vadd.f32 %v1055, %v1056
    %v1058 = vsel %vm793, %v958, 0.0
    %v1059 = vadd.f32 %v1057, %v1058
    %v1060 = vsel %vm793, %v959, 0.0
    %v1061 = vadd.f32 %v1059, %v1060
    %v1062 = vsel %vm793, %v960, 0.0
    %v1063 = vadd.f32 %v1061, %v1062
    %v1064 = vsel %vm793, %v961, 0.0
    %v1065 = vadd.f32 %v1063, %v1064
    %v1066 = vsel %vm793, %v962, 0.0
    %v1067 = vadd.f32 %v1065, %v1066
    %v1068 = vsel %vm793, %v963, 0.0
    %v1069 = vadd.f32 %v1067, %v1068
    %v1070 = vsel %vm793, %v964, 0.0
    %v1071 = vadd.f32 %v1069, %v1070
    %v1072 = vsel %vm793, %v965, 0.0
    %v1073 = vadd.f32 %v1071, %v1072
    %v1074 = vsel %vm793, %v966, 0.0
    %v1075 = vadd.f32 %v1073, %v1074
    %v1076 = vsel %vm793, %v967, 0.0
    %v1077 = vadd.f32 %v1075, %v1076
    %v1078 = vsel %vm793, %v968, 0.0
    %v1079 = vadd.f32 %v1077, %v1078
    %v1080 = vsel %vm793, %v969, 0.0
    %v1081 = vadd.f32 %v1079, %v1080
    %v1082 = vsel %vm905, %v970, 0.0
    %v1083 = vadd.f32 %v1081, %v1082
    %v1084 = vrot.slane %v1083, 4
    %v1085 = vadd.f32 %v1083, %v1084
    %v1086 = vrot.slane %v1085, 2
    %v1087 = vadd.f32 %v1085, %v1086
    %v1088 = vrot.slane %v1087, 1
    %v1089 = vadd.f32 %v1087, %v1088
    %v1090 = vld [vmem:[%s4] sm:$0x1]
    %v1091 = vld [vmem:[%s5] sm:$0x1]
    %v1092 = vmul.f32 %v913, 0.0022222223
    %v1093 = vmul.f32 %v1089, 0.0022222223
    %v1094 = vmul.f32 %v1092, %v1092
    %v1095 = vsub.f32 %v1093, %v1094
    %v1096 = vmax.f32 %v1095, 0.0
    %v1097 = vadd.f32 %v1096, 1e-05
    %v1098 = vrsqrt.pop %v1097
    %v1099 = vmul.f32 %v1090, %v1098
    %v1100 = vmul.f32 %v1092, %v1099
    %v1101 = vsub.f32 %v1091, %v1100
    %v1103 = vlaneseq
    %v1104 = vshrl.u32 %v1103, 7
    %v1105 = vsub.s32 0, %v1104
    %v1106 = vrot.slane %v1099, %v1105
    %v1108 = vmul.f32 %v736, %v1106
    %v1109 = vmul.f32 %v737, %v1106
    %v1110 = vmul.f32 %v738, %v1106
    %v1111 = vmul.f32 %v739, %v1106
    %v1112 = vmul.f32 %v740, %v1106
    %v1113 = vmul.f32 %v741, %v1106
    %v1114 = vmul.f32 %v742, %v1106
    %v1115 = vmul.f32 %v743, %v1106
    %v1116 = vmul.f32 %v744, %v1106
    %v1117 = vmul.f32 %v745, %v1106
    %v1118 = vmul.f32 %v746, %v1106
    %v1119 = vmul.f32 %v747, %v1106
    %v1120 = vmul.f32 %v748, %v1106
    %v1121 = vmul.f32 %v749, %v1106
    %v1122 = vmul.f32 %v750, %v1106
    %v1123 = vmul.f32 %v751, %v1106
    %v1125 = vlaneseq
    %v1126 = vshrl.u32 %v1125, 7
    %v1127 = vsub.s32 0, %v1126
    %v1128 = vrot.slane %v1101, %v1127
    %v1130 = vadd.f32 %v1108, %v1128
    %v1131 = vadd.f32 %v1109, %v1128
    %v1132 = vadd.f32 %v1110, %v1128
    %v1133 = vadd.f32 %v1111, %v1128
    %v1134 = vadd.f32 %v1112, %v1128
    %v1135 = vadd.f32 %v1113, %v1128
    %v1136 = vadd.f32 %v1114, %v1128
    %v1137 = vadd.f32 %v1115, %v1128
    %v1138 = vadd.f32 %v1116, %v1128
    %v1139 = vadd.f32 %v1117, %v1128
    %v1140 = vadd.f32 %v1118, %v1128
    %v1141 = vadd.f32 %v1119, %v1128
    %v1142 = vadd.f32 %v1120, %v1128
    %v1143 = vadd.f32 %v1121, %v1128
    %v1144 = vadd.f32 %v1122, %v1128
    %v1145 = vadd.f32 %v1123, %v1128
    %v1146 = vmax.f32 %v1130, %v1134
    %v1147 = vmax.f32 %v1131, %v1135
    %v1148 = vmax.f32 %v1132, %v1136
    %v1149 = vmax.f32 %v1133, %v1137
    %v1150 = vmax.f32 %v1138, %v1142
    %v1151 = vmax.f32 %v1139, %v1143
    %v1152 = vmax.f32 %v1140, %v1144
    %v1153 = vmax.f32 %v1141, %v1145
    %v1154 = vmax.f32 %v1146, %v1150
    %v1155 = vmax.f32 %v1147, %v1151
    %v1156 = vmax.f32 %v1148, %v1152
    %v1157 = vmax.f32 %v1149, %v1153
    %vm1162 = vcmask 1041408
    %v1163 = vrot.slane %v1154, 6
    %v1164 = vrot.slane %v1155, 6
    %v1165 = vsel %vm1162, %v1163, %v1164
    %v1166 = vrot.slane %v1156, 6
    %v1167 = vsel %vm1162, %v1164, %v1166
    %v1168 = vrot.slane %v1157, 6
    %v1169 = vsel %vm1162, %v1166, %v1168
    %v1175 = vsel %vm1162, 0.0, %v1163
    %v1176 = vsel %vm1162, %v1168, 0.0
    %v1177 = vld [vmem:[%s1] sm:$0xff]
    %v1178 = vld [vmem:[%s1 + $0x8] sm:$0xff]
    %v1179 = vld [vmem:[%s1 + $0x10] sm:$0xff]
    %v1180 = vld [vmem:[%s1 + $0x18] sm:$0xff]
    %1182 = vset.pattern.permute.xlu0 0
    %1183 = vperm.xlu0 %1182, %v1177
    %v1184 = vpop.permute.xlu0 %1183
    %1187 = vset.pattern.permute.xlu0 0
    %1188 = vperm.xlu0 %1187, %v1178
    %v1189 = vpop.permute.xlu0 %1188
    %1192 = vset.pattern.permute.xlu0 0
    %1193 = vperm.xlu0 %1192, %v1179
    %v1194 = vpop.permute.xlu0 %1193
    %1197 = vset.pattern.permute.xlu0 0
    %1198 = vperm.xlu0 %1197, %v1180
    %v1199 = vpop.permute.xlu0 %1198
    %v1201 = vmul.f32 %v1184, 0.0
    %v1202 = vmul.f32 %v1175, %v1189
    %v1203 = vmul.f32 %v1165, %v1194
    %v1204 = vmul.f32 %v1167, %v1199
    %1205 = vset.pattern.permute.xlu0 2
    %1206 = vperm.xlu0 %1205, %v1177
    %v1207 = vpop.permute.xlu0 %1206
    %1208 = vset.pattern.permute.xlu0 2
    %1209 = vperm.xlu0 %1208, %v1178
    %v1210 = vpop.permute.xlu0 %1209
    %1211 = vset.pattern.permute.xlu0 2
    %1212 = vperm.xlu0 %1211, %v1179
    %v1213 = vpop.permute.xlu0 %1212
    %1214 = vset.pattern.permute.xlu0 2
    %1215 = vperm.xlu0 %1214, %v1180
    %v1216 = vpop.permute.xlu0 %1215
    %vm1217 = vcmask 1043456
    %v1218 = vrot.slane %v1207, 4
    %v1219 = vrot.slane %v1210, 4
    %v1220 = vsel %vm1217, %v1218, %v1219
    %v1221 = vrot.slane %v1213, 4
    %v1222 = vsel %vm1217, %v1219, %v1221
    %v1223 = vrot.slane %v1216, 4
    %v1224 = vsel %vm1217, %v1221, %v1223
    %v1230 = vmul.f32 %v1218, 0.0
    %v1231 = vmul.f32 %v1175, %v1220
    %v1232 = vmul.f32 %v1165, %v1222
    %v1233 = vmul.f32 %v1167, %v1224
    %v1234 = vmul.f32 %v1169, %v1223
    %1235 = vset.pattern.permute.xlu0 3
    %1236 = vperm.xlu0 %1235, %v1177
    %v1237 = vpop.permute.xlu0 %1236
    %1239 = vset.pattern.permute.xlu0 3
    %1240 = vperm.xlu0 %1239, %v1178
    %v1241 = vpop.permute.xlu0 %1240
    %1243 = vset.pattern.permute.xlu0 3
    %1244 = vperm.xlu0 %1243, %v1179
    %v1245 = vpop.permute.xlu0 %1244
    %1247 = vset.pattern.permute.xlu0 3
    %1248 = vperm.xlu0 %1247, %v1180
    %v1249 = vpop.permute.xlu0 %1248
    %v1251 = vmul.f32 %v1175, %v1237
    %v1252 = vmul.f32 %v1165, %v1241
    %v1253 = vmul.f32 %v1167, %v1245
    %v1254 = vmul.f32 %v1169, %v1249
    %1255 = vset.pattern.permute.xlu0 5
    %1256 = vperm.xlu0 %1255, %v1177
    %v1257 = vpop.permute.xlu0 %1256
    %1258 = vset.pattern.permute.xlu0 5
    %1259 = vperm.xlu0 %1258, %v1178
    %v1260 = vpop.permute.xlu0 %1259
    %1261 = vset.pattern.permute.xlu0 5
    %1262 = vperm.xlu0 %1261, %v1179
    %v1263 = vpop.permute.xlu0 %1262
    %1264 = vset.pattern.permute.xlu0 5
    %1265 = vperm.xlu0 %1264, %v1180
    %v1266 = vpop.permute.xlu0 %1265
    %v1267 = vrot.slane %v1257, 4
    %v1268 = vrot.slane %v1260, 4
    %v1269 = vsel %vm1217, %v1267, %v1268
    %v1270 = vrot.slane %v1263, 4
    %v1271 = vsel %vm1217, %v1268, %v1270
    %v1272 = vrot.slane %v1266, 4
    %v1273 = vsel %vm1217, %v1270, %v1272
    %v1279 = vmul.f32 %v1175, %v1267
    %v1280 = vmul.f32 %v1165, %v1269
    %v1281 = vmul.f32 %v1167, %v1271
    %v1282 = vmul.f32 %v1169, %v1273
    %v1283 = vmul.f32 %v1176, %v1272
    %1284 = vset.pattern.permute.xlu0 6
    %1285 = vperm.xlu0 %1284, %v1177
    %v1286 = vpop.permute.xlu0 %1285
    %1288 = vset.pattern.permute.xlu0 6
    %1289 = vperm.xlu0 %1288, %v1178
    %v1290 = vpop.permute.xlu0 %1289
    %1292 = vset.pattern.permute.xlu0 6
    %1293 = vperm.xlu0 %1292, %v1179
    %v1294 = vpop.permute.xlu0 %1293
    %1296 = vset.pattern.permute.xlu0 6
    %1297 = vperm.xlu0 %1296, %v1180
    %v1298 = vpop.permute.xlu0 %1297
    %v1300 = vmul.f32 %v1165, %v1286
    %v1301 = vmul.f32 %v1167, %v1290
    %v1302 = vmul.f32 %v1169, %v1294
    %v1303 = vmul.f32 %v1176, %v1298
    %1304 = vset.pattern.permute.xlu0 8
    %1305 = vperm.xlu0 %1304, %v1177
    %v1306 = vpop.permute.xlu0 %1305
    %1307 = vset.pattern.permute.xlu0 8
    %1308 = vperm.xlu0 %1307, %v1178
    %v1309 = vpop.permute.xlu0 %1308
    %1310 = vset.pattern.permute.xlu0 8
    %1311 = vperm.xlu0 %1310, %v1179
    %v1312 = vpop.permute.xlu0 %1311
    %1313 = vset.pattern.permute.xlu0 8
    %1314 = vperm.xlu0 %1313, %v1180
    %v1315 = vpop.permute.xlu0 %1314
    %v1316 = vrot.slane %v1306, 4
    %v1317 = vrot.slane %v1309, 4
    %v1318 = vsel %vm1217, %v1316, %v1317
    %v1319 = vrot.slane %v1312, 4
    %v1320 = vsel %vm1217, %v1317, %v1319
    %v1321 = vrot.slane %v1315, 4
    %v1322 = vsel %vm1217, %v1319, %v1321
    %v1328 = vmul.f32 %v1165, %v1316
    %v1329 = vmul.f32 %v1167, %v1318
    %v1330 = vmul.f32 %v1169, %v1320
    %v1331 = vmul.f32 %v1176, %v1322
    %v1332 = vmul.f32 %v1321, 0.0
    %vm1335 = vcmask 1045504
    %v1336 = vrot.slane 0.0, 2
    %v1337 = vrot.slane %v1175, 2
    %v1338 = vsel %vm1335, %v1336, %v1337
    %v1339 = vrot.slane %v1165, 2
    %v1340 = vsel %vm1335, %v1337, %v1339
    %v1341 = vrot.slane %v1167, 2
    %v1342 = vsel %vm1335, %v1339, %v1341
    %v1343 = vrot.slane %v1169, 2
    %v1344 = vsel %vm1335, %v1341, %v1343
    %1345 = vrot.lane.b32.xlu0 %v1338, 64
    %v1346 = vpop.permute.xlu0 %1345
    %1347 = vrot.lane.b32.xlu0 %v1340, 64
    %v1348 = vpop.permute.xlu0 %1347
    %1349 = vrot.lane.b32.xlu0 %v1342, 64
    %v1350 = vpop.permute.xlu0 %1349
    %1351 = vrot.lane.b32.xlu0 %v1344, 64
    %v1352 = vpop.permute.xlu0 %1351
    %v1362 = vrot.slane %v1230, 4
    %v1363 = vrot.slane %v1231, 4
    %v1364 = vsel %vm1217, %v1362, %v1363
    %v1365 = vrot.slane %v1232, 4
    %v1366 = vsel %vm1217, %v1363, %v1365
    %v1367 = vrot.slane %v1233, 4
    %v1368 = vsel %vm1217, %v1365, %v1367
    %v1369 = vrot.slane %v1234, 4
    %v1370 = vsel %vm1217, %v1367, %v1369
    %1379 = vrot.lane.b32.xlu0 %v1251, 64
    %v1380 = vpop.permute.xlu0 %1379
    %1381 = vrot.lane.b32.xlu0 %v1252, 64
    %v1382 = vpop.permute.xlu0 %1381
    %1383 = vrot.lane.b32.xlu0 %v1253, 64
    %v1384 = vpop.permute.xlu0 %1383
    %1385 = vrot.lane.b32.xlu0 %v1254, 64
    %v1386 = vpop.permute.xlu0 %1385
    %v1392 = vrot.slane %v1176, 2
    %v1393 = vsel %vm1335, %v1343, %v1392
    %v1403 = vrot.slane %v1279, 4
    %v1404 = vrot.slane %v1280, 4
    %v1405 = vsel %vm1217, %v1403, %v1404
    %v1406 = vrot.slane %v1281, 4
    %v1407 = vsel %vm1217, %v1404, %v1406
    %v1408 = vrot.slane %v1282, 4
    %v1409 = vsel %vm1217, %v1406, %v1408
    %v1410 = vrot.slane %v1283, 4
    %v1411 = vsel %vm1217, %v1408, %v1410
    %1412 = vrot.lane.b32.xlu0 %v1405, 64
    %v1413 = vpop.permute.xlu0 %1412
    %1414 = vrot.lane.b32.xlu0 %v1407, 64
    %v1415 = vpop.permute.xlu0 %1414
    %1416 = vrot.lane.b32.xlu0 %v1409, 64
    %v1417 = vpop.permute.xlu0 %1416
    %1418 = vrot.lane.b32.xlu0 %v1411, 64
    %v1419 = vpop.permute.xlu0 %1418
    %v1424 = vsel %vm1335, %v1392, %v1336
    %1425 = vrot.lane.b32.xlu0 %v1393, 64
    %v1426 = vpop.permute.xlu0 %1425
    %1427 = vrot.lane.b32.xlu0 %v1424, 64
    %v1428 = vpop.permute.xlu0 %1427
    %v1436 = vrot.slane %v1328, 4
    %v1437 = vrot.slane %v1329, 4
    %v1438 = vsel %vm1217, %v1436, %v1437
    %v1439 = vrot.slane %v1330, 4
    %v1440 = vsel %vm1217, %v1437, %v1439
    %v1441 = vrot.slane %v1331, 4
    %v1442 = vsel %vm1217, %v1439, %v1441
    %v1443 = vrot.slane %v1332, 4
    %v1444 = vsel %vm1217, %v1441, %v1443
    %v1449 = vsel %vm793, %v1201, %v1346
    %v1450 = vsel %vm793, %v1202, %v1348
    %v1451 = vsel %vm793, %v1203, %v1350
    %v1452 = vsel %vm793, %v1204, %v1352
    %v1453 = vsel %vm793, %v1364, %v1380
    %v1454 = vsel %vm793, %v1366, %v1382
    %v1455 = vsel %vm793, %v1368, %v1384
    %v1456 = vsel %vm793, %v1370, %v1386
    %v1457 = vsel %vm793, %v1340, %v1413
    %v1458 = vsel %vm793, %v1342, %v1415
    %v1459 = vsel %vm793, %v1344, %v1417
    %v1460 = vsel %vm793, %v1393, %v1419
    %v1461 = vsel %vm793, %v1300, %v1350
    %v1462 = vsel %vm793, %v1301, %v1352
    %v1463 = vsel %vm793, %v1302, %v1426
    %v1464 = vsel %vm793, %v1303, %v1428
    %v1465 = vpack.c.bf16 %v1450, %v1449
    %v1466 = vpack.c.bf16 %v1454, %v1453
    %v1467 = vpack.c.bf16 %v1458, %v1457
    %v1468 = vpack.c.bf16 %v1462, %v1461
    %v1469 = vpack.c.bf16 %v1440, %v1438
    %v1470 = vpack.c.bf16 %v1452, %v1451
    %v1471 = vpack.c.bf16 %v1456, %v1455
    %v1472 = vpack.c.bf16 %v1460, %v1459
    %v1473 = vpack.c.bf16 %v1464, %v1463
    %v1474 = vpack.c.bf16 %v1444, %v1442
    %v1475 = vld [vmem:[%s6] sm:$0xf]
    %v1476 = vld [vmem:[%s6 + $0x4] sm:$0xf]
    %v1477 = vld [vmem:[%s6 + $0x8] sm:$0xf]
    %v1478 = vld [vmem:[%s6 + $0xc] sm:$0xf]
    %v1479 = vld [vmem:[%s6 + $0x10] sm:$0xf]
    %v1480 = vld [vmem:[%s6 + $0x14] sm:$0xf]
    %v1481 = vld [vmem:[%s6 + $0x18] sm:$0xf]
    %v1482 = vld [vmem:[%s6 + $0x1c] sm:$0xf]
    %v1483 = vld [vmem:[%s6 + $0x20] sm:$0xf]
    %v1484 = vld [vmem:[%s6 + $0x24] sm:$0xf]
    %v1485 = vld [vmem:[%s6 + $0x28] sm:$0xf]
    %v1486 = vld [vmem:[%s6 + $0x2c] sm:$0xf]
    %v1487 = vld [vmem:[%s6 + $0x30] sm:$0xf]
    %v1488 = vld [vmem:[%s6 + $0x34] sm:$0xf]
    %v1489 = vld [vmem:[%s6 + $0x38] sm:$0xf]
    %v1490 = vld [vmem:[%s6 + $0x3c] sm:$0xf]
    %v1491 = vld [vmem:[%s6 + $0x40] sm:$0xf]
    %v1492 = vld [vmem:[%s6 + $0x44] sm:$0xf]
    %v1493 = vld [vmem:[%s6 + $0x48] sm:$0xf]
    %v1494 = vld [vmem:[%s6 + $0x4c] sm:$0xf]
    %v1495 = vld [vmem:[%s6 + $0x50] sm:$0xf]
    %v1496 = vld [vmem:[%s6 + $0x54] sm:$0xf]
    %v1497 = vld [vmem:[%s6 + $0x58] sm:$0xf]
    %v1498 = vld [vmem:[%s6 + $0x5c] sm:$0xf]
    %v1499 = vld [vmem:[%s6 + $0x60] sm:$0xf]
    %v1500 = vld [vmem:[%s6 + $0x64] sm:$0xf]
    %v1501 = vld [vmem:[%s6 + $0x68] sm:$0xf]
    %v1502 = vld [vmem:[%s6 + $0x6c] sm:$0xf]
    %v1503 = vld [vmem:[%s6 + $0x70] sm:$0xf]
    %v1504 = vld [vmem:[%s6 + $0x74] sm:$0xf]
    %v1505 = vld [vmem:[%s6 + $0x78] sm:$0xf]
    %v1506 = vld [vmem:[%s6 + $0x7c] sm:$0xf]
    %v1507 = vld [vmem:[%s6 + $0x80] sm:$0xf]
    %v1508 = vld [vmem:[%s6 + $0x84] sm:$0xf]
    %v1509 = vld [vmem:[%s6 + $0x88] sm:$0xf]
    %v1510 = vld [vmem:[%s6 + $0x8c] sm:$0xf]
    %v1511 = vld [vmem:[%s6 + $0x90] sm:$0xf]
    %v1512 = vld [vmem:[%s6 + $0x94] sm:$0xf]
    %v1513 = vld [vmem:[%s6 + $0x98] sm:$0xf]
    %v1514 = vld [vmem:[%s6 + $0x9c] sm:$0xf]
    %v1515 = vld [vmem:[%s6 + $0xa0] sm:$0xf]
    %v1516 = vld [vmem:[%s6 + $0xa4] sm:$0xf]
    %v1517 = vld [vmem:[%s6 + $0xa8] sm:$0xf]
    %v1518 = vld [vmem:[%s6 + $0xac] sm:$0xf]
    %v1519 = vld [vmem:[%s6 + $0xb0] sm:$0xf]
    %v1520 = vld [vmem:[%s6 + $0xb4] sm:$0xf]
    %v1521 = vld [vmem:[%s6 + $0xb8] sm:$0xf]
    %v1522 = vld [vmem:[%s6 + $0xbc] sm:$0xf]
    %v1523 = vld [vmem:[%s6 + $0xc0] sm:$0xf]
    %v1524 = vld [vmem:[%s6 + $0xc4] sm:$0xf]
    %v1525 = vld [vmem:[%s6 + $0xc8] sm:$0xf]
    %v1526 = vld [vmem:[%s6 + $0xcc] sm:$0xf]
    %v1527 = vld [vmem:[%s6 + $0xd0] sm:$0xf]
    %v1528 = vld [vmem:[%s6 + $0xd4] sm:$0xf]
    %v1529 = vld [vmem:[%s6 + $0xd8] sm:$0xf]
    %v1530 = vld [vmem:[%s6 + $0xdc] sm:$0xf]
    %v1531 = vld [vmem:[%s6 + $0xe0] sm:$0xf]
    %v1532 = vld [vmem:[%s6 + $0xe4] sm:$0xf]
    %v1533 = vld [vmem:[%s6 + $0xe8] sm:$0xf]
    %v1534 = vld [vmem:[%s6 + $0xec] sm:$0xf]
    %v1535 = vld [vmem:[%s6 + $0xf0] sm:$0xf]
    %v1536 = vld [vmem:[%s6 + $0xf4] sm:$0xf]
    %v1537 = vld [vmem:[%s6 + $0xf8] sm:$0xf]
    %v1538 = vld [vmem:[%s6 + $0xfc] sm:$0xf]
    %v1539 = vld [vmem:[%s6 + $0x100] sm:$0xf]
    %v1540 = vld [vmem:[%s6 + $0x104] sm:$0xf]
    %v1541 = vld [vmem:[%s6 + $0x108] sm:$0xf]
    %v1542 = vld [vmem:[%s6 + $0x10c] sm:$0xf]
    %v1543 = vld [vmem:[%s6 + $0x110] sm:$0xf]
    %v1544 = vld [vmem:[%s6 + $0x114] sm:$0xf]
    %v1545 = vld [vmem:[%s6 + $0x118] sm:$0xf]
    %v1546 = vld [vmem:[%s6 + $0x11c] sm:$0xf]
    %v1547 = vld [vmem:[%s7] sm:$0x1]
    %v1549 = vlaneseq
    %v1550 = vshrl.u32 %v1549, 7
    %v1551 = vsub.s32 0, %v1550
    %v1552 = vrot.slane %v1547, %v1551
    %v1626 = vunpack.c.l.b16 %v1475
    %v1627 = vunpack.c.l.b16 %v1476
    %v1628 = vunpack.c.l.b16 %v1477
    %v1629 = vunpack.c.l.b16 %v1478
    %v1630 = vunpack.c.l.b16 %v1479
    %v1631 = vunpack.c.l.b16 %v1480
    %v1632 = vunpack.c.l.b16 %v1481
    %v1633 = vunpack.c.l.b16 %v1482
    %v1634 = vunpack.c.l.b16 %v1483
    %v1635 = vunpack.c.l.b16 %v1484
    %v1636 = vunpack.c.l.b16 %v1485
    %v1637 = vunpack.c.l.b16 %v1486
    %v1638 = vunpack.c.l.b16 %v1487
    %v1639 = vunpack.c.l.b16 %v1488
    %v1640 = vunpack.c.l.b16 %v1489
    %v1641 = vunpack.c.l.b16 %v1490
    %v1642 = vunpack.c.l.b16 %v1491
    %v1643 = vunpack.c.l.b16 %v1492
    %v1644 = vunpack.c.l.b16 %v1493
    %v1645 = vunpack.c.l.b16 %v1494
    %v1646 = vunpack.c.l.b16 %v1495
    %v1647 = vunpack.c.l.b16 %v1496
    %v1648 = vunpack.c.l.b16 %v1497
    %v1649 = vunpack.c.l.b16 %v1498
    %v1650 = vunpack.c.l.b16 %v1499
    %v1651 = vunpack.c.l.b16 %v1500
    %v1652 = vunpack.c.l.b16 %v1501
    %v1653 = vunpack.c.l.b16 %v1502
    %v1654 = vunpack.c.l.b16 %v1503
    %v1655 = vunpack.c.l.b16 %v1504
    %v1656 = vunpack.c.l.b16 %v1505
    %v1657 = vunpack.c.l.b16 %v1506
    %v1658 = vunpack.c.l.b16 %v1507
    %v1659 = vunpack.c.l.b16 %v1508
    %v1660 = vunpack.c.l.b16 %v1509
    %v1661 = vunpack.c.l.b16 %v1510
    %v1662 = vunpack.c.l.b16 %v1511
    %v1663 = vunpack.c.l.b16 %v1512
    %v1664 = vunpack.c.l.b16 %v1513
    %v1665 = vunpack.c.l.b16 %v1514
    %v1666 = vunpack.c.l.b16 %v1515
    %v1667 = vunpack.c.l.b16 %v1516
    %v1668 = vunpack.c.l.b16 %v1517
    %v1669 = vunpack.c.l.b16 %v1518
    %v1670 = vunpack.c.l.b16 %v1519
    %v1671 = vunpack.c.l.b16 %v1520
    %v1672 = vunpack.c.l.b16 %v1521
    %v1673 = vunpack.c.l.b16 %v1522
    %v1674 = vunpack.c.l.b16 %v1523
    %v1675 = vunpack.c.l.b16 %v1524
    %v1676 = vunpack.c.l.b16 %v1525
    %v1677 = vunpack.c.l.b16 %v1526
    %v1678 = vunpack.c.l.b16 %v1527
    %v1679 = vunpack.c.l.b16 %v1528
    %v1680 = vunpack.c.l.b16 %v1529
    %v1681 = vunpack.c.l.b16 %v1530
    %v1682 = vunpack.c.l.b16 %v1531
    %v1683 = vunpack.c.l.b16 %v1532
    %v1684 = vunpack.c.l.b16 %v1533
    %v1685 = vunpack.c.l.b16 %v1534
    %v1686 = vunpack.c.l.b16 %v1535
    %v1687 = vunpack.c.l.b16 %v1536
    %v1688 = vunpack.c.l.b16 %v1537
    %v1689 = vunpack.c.l.b16 %v1538
    %v1690 = vunpack.c.l.b16 %v1539
    %v1691 = vunpack.c.l.b16 %v1540
    %v1692 = vunpack.c.l.b16 %v1541
    %v1693 = vunpack.c.l.b16 %v1542
    %v1694 = vunpack.c.l.b16 %v1543
    %v1695 = vunpack.c.l.b16 %v1544
    %v1696 = vunpack.c.l.b16 %v1545
    %v1697 = vunpack.c.l.b16 %v1546
    %v1698 = vpack.c.b16 %v1627, %v1626
    %v1699 = vpack.c.b16 %v1629, %v1628
    %v1700 = vpack.c.b16 %v1631, %v1630
    %v1701 = vpack.c.b16 %v1633, %v1632
    %v1702 = vpack.c.b16 %v1635, %v1634
    %v1703 = vpack.c.b16 %v1637, %v1636
    %v1704 = vpack.c.b16 %v1639, %v1638
    %v1705 = vpack.c.b16 %v1641, %v1640
    %v1706 = vpack.c.b16 %v1643, %v1642
    %v1707 = vpack.c.b16 %v1645, %v1644
    %v1708 = vpack.c.b16 %v1647, %v1646
    %v1709 = vpack.c.b16 %v1649, %v1648
    %v1710 = vpack.c.b16 %v1651, %v1650
    %v1711 = vpack.c.b16 %v1653, %v1652
    %v1712 = vpack.c.b16 %v1655, %v1654
    %v1713 = vpack.c.b16 %v1657, %v1656
    %v1714 = vpack.c.b16 %v1659, %v1658
    %v1715 = vpack.c.b16 %v1661, %v1660
    %v1716 = vpack.c.b16 %v1663, %v1662
    %v1717 = vpack.c.b16 %v1665, %v1664
    %v1718 = vpack.c.b16 %v1667, %v1666
    %v1719 = vpack.c.b16 %v1669, %v1668
    %v1720 = vpack.c.b16 %v1671, %v1670
    %v1721 = vpack.c.b16 %v1673, %v1672
    %v1722 = vpack.c.b16 %v1675, %v1674
    %v1723 = vpack.c.b16 %v1677, %v1676
    %v1724 = vpack.c.b16 %v1679, %v1678
    %v1725 = vpack.c.b16 %v1681, %v1680
    %v1726 = vpack.c.b16 %v1683, %v1682
    %v1727 = vpack.c.b16 %v1685, %v1684
    %v1728 = vpack.c.b16 %v1687, %v1686
    %v1729 = vpack.c.b16 %v1689, %v1688
    %v1730 = vpack.c.b16 %v1691, %v1690
    %v1731 = vpack.c.b16 %v1693, %v1692
    %v1732 = vpack.c.b16 %v1695, %v1694
    %v1733 = vpack.c.b16 %v1697, %v1696
    %v1771 = vsel %vm793, %v1469, 0
    %v1774 = vsel %vm793, %v1474, 0
    %1776 = vmatprep.subr.bf16.mxu0 0
    %1777 = vmatpush1.bf16.msra.mxu0 %v1705
    %1778 = vmatprep.subr.bf16.mxu0 0
    %1779 = vmatpush1.bf16.msra.mxu0 %v1704
    %1780 = vmatprep.subr.bf16.mxu0 0
    %1781 = vmatpush1.bf16.msra.mxu0 %v1703
    %1782 = vmatprep.subr.bf16.mxu0 0
    %1783 = vmatpush1.bf16.msra.mxu0 %v1702
    %1784 = vmatprep.subr.bf16.mxu0 0
    %1785 = vmatpush1.bf16.msra.mxu0 %v1701
    %1786 = vmatprep.subr.bf16.mxu0 0
    %1787 = vmatpush1.bf16.msra.mxu0 %v1700
    %1788 = vmatprep.subr.bf16.mxu0 0
    %1789 = vmatpush1.bf16.msra.mxu0 %v1699
    %1790 = vmatprep.subr.bf16.mxu0 0
    %1791 = vmatpush1.bf16.msra.mxu0 %v1698
    %1792 = vmatprep.subr.bf16.mxu0 0
    %1793 = vmatpush2.bf16.msra.mxu0 %v1713
    %1794 = vmatprep.subr.bf16.mxu0 0
    %1795 = vmatpush2.bf16.msra.mxu0 %v1712
    %1796 = vmatprep.subr.bf16.mxu0 0
    %1797 = vmatpush2.bf16.msra.mxu0 %v1711
    %1798 = vmatprep.subr.bf16.mxu0 0
    %1799 = vmatpush2.bf16.msra.mxu0 %v1710
    %1800 = vmatprep.subr.bf16.mxu0 0
    %1801 = vmatpush2.bf16.msra.mxu0 %v1709
    %1802 = vmatprep.subr.bf16.mxu0 0
    %1803 = vmatpush2.bf16.msra.mxu0 %v1708
    %1804 = vmatprep.subr.bf16.mxu0 0
    %1805 = vmatpush2.bf16.msra.mxu0 %v1707
    %1806 = vmatprep.subr.bf16.mxu0 0
    %1807 = vmatpush2.bf16.msra.mxu0 %v1706
    %1808 = vmatprep.mubr.bf16.mxu0 %v1466
    %1809 = vmatmul.mubr.bf16.gmra.mxu0 %v1465
    %v1810 = vpop.f32.mrf.mxu0
    %v1811 = vadd.f32 %v1552, %v1810
    %v1812 = vpop.f32.mrf.mxu0
    %v1813 = vpop.f32.mrf.mxu0
    %v1814 = vadd.f32 %v1552, %v1813
    %v1815 = vpop.f32.mrf.mxu0
    %1816 = vmatprep.mubr.bf16.mxu0 %v1471
    %1817 = vmatmul.mubr.bf16.gmra.mxu0 %v1470
    %v1818 = vpop.f32.mrf.mxu0
    %v1819 = vadd.f32 %v1552, %v1818
    %v1820 = vpop.f32.mrf.mxu0
    %v1821 = vpop.f32.mrf.mxu0
    %v1822 = vadd.f32 %v1552, %v1821
    %v1823 = vpop.f32.mrf.mxu0
    %1824 = vdwg.mxu0
    %1825 = vmatprep.subr.bf16.mxu0 0
    %1826 = vmatpush1.bf16.msra.mxu0 %v1721
    %1827 = vmatprep.subr.bf16.mxu0 0
    %1828 = vmatpush1.bf16.msra.mxu0 %v1720
    %1829 = vmatprep.subr.bf16.mxu0 0
    %1830 = vmatpush1.bf16.msra.mxu0 %v1719
    %1831 = vmatprep.subr.bf16.mxu0 0
    %1832 = vmatpush1.bf16.msra.mxu0 %v1718
    %1833 = vmatprep.subr.bf16.mxu0 0
    %1834 = vmatpush1.bf16.msra.mxu0 %v1717
    %1835 = vmatprep.subr.bf16.mxu0 0
    %1836 = vmatpush1.bf16.msra.mxu0 %v1716
    %1837 = vmatprep.subr.bf16.mxu0 0
    %1838 = vmatpush1.bf16.msra.mxu0 %v1715
    %1839 = vmatprep.subr.bf16.mxu0 0
    %1840 = vmatpush1.bf16.msra.mxu0 %v1714
    %1841 = vmatprep.subr.bf16.mxu0 0
    %1842 = vmatpush2.bf16.msra.mxu0 %v1729
    %1843 = vmatprep.subr.bf16.mxu0 0
    %1844 = vmatpush2.bf16.msra.mxu0 %v1728
    %1845 = vmatprep.subr.bf16.mxu0 0
    %1846 = vmatpush2.bf16.msra.mxu0 %v1727
    %1847 = vmatprep.subr.bf16.mxu0 0
    %1848 = vmatpush2.bf16.msra.mxu0 %v1726
    %1849 = vmatprep.subr.bf16.mxu0 0
    %1850 = vmatpush2.bf16.msra.mxu0 %v1725
    %1851 = vmatprep.subr.bf16.mxu0 0
    %1852 = vmatpush2.bf16.msra.mxu0 %v1724
    %1853 = vmatprep.subr.bf16.mxu0 0
    %1854 = vmatpush2.bf16.msra.mxu0 %v1723
    %1855 = vmatprep.subr.bf16.mxu0 0
    %1856 = vmatpush2.bf16.msra.mxu0 %v1722
    %1857 = vmatprep.mubr.bf16.mxu0 %v1468
    %1858 = vmatmul.mubr.bf16.gmra.mxu0 %v1467
    %v1859 = vpop.f32.mrf.mxu0
    %v1860 = vadd.f32 %v1811, %v1859
    %v1861 = vpop.f32.mrf.mxu0
    %v1862 = vpop.f32.mrf.mxu0
    %v1863 = vadd.f32 %v1814, %v1862
    %v1864 = vpop.f32.mrf.mxu0
    %1865 = vmatprep.mubr.bf16.mxu0 %v1473
    %1866 = vmatmul.mubr.bf16.gmra.mxu0 %v1472
    %v1867 = vpop.f32.mrf.mxu0
    %v1868 = vadd.f32 %v1819, %v1867
    %v1869 = vpop.f32.mrf.mxu0
    %v1870 = vpop.f32.mrf.mxu0
    %v1871 = vadd.f32 %v1822, %v1870
    %v1872 = vpop.f32.mrf.mxu0
    %1873 = vdwg.mxu0
    %1874 = vmatprep.subr.bf16.mxu0 0
    %1875 = vmatpush1.bf16.msra.mxu0 0
    %1876 = vmatprep.subr.bf16.mxu0 0
    %1877 = vmatpush1.bf16.msra.mxu0 0
    %1878 = vmatprep.subr.bf16.mxu0 0
    %1879 = vmatpush1.bf16.msra.mxu0 0
    %1880 = vmatprep.subr.bf16.mxu0 0
    %1881 = vmatpush1.bf16.msra.mxu0 0
    %1882 = vmatprep.subr.bf16.mxu0 0
    %1883 = vmatpush1.bf16.msra.mxu0 %v1733
    %1884 = vmatprep.subr.bf16.mxu0 0
    %1885 = vmatpush1.bf16.msra.mxu0 %v1732
    %1886 = vmatprep.subr.bf16.mxu0 0
    %1887 = vmatpush1.bf16.msra.mxu0 %v1731
    %1888 = vmatprep.subr.bf16.mxu0 0
    %1889 = vmatpush1.bf16.msra.mxu0 %v1730
    %1890 = vmatprep.subr.bf16.mxu0 0
    %1891 = vmatpush2.bf16.msra.mxu0 0
    %1892 = vmatprep.subr.bf16.mxu0 0
    %1893 = vmatpush2.bf16.msra.mxu0 0
    %1894 = vmatprep.subr.bf16.mxu0 0
    %1895 = vmatpush2.bf16.msra.mxu0 0
    %1896 = vmatprep.subr.bf16.mxu0 0
    %1897 = vmatpush2.bf16.msra.mxu0 0
    %1898 = vmatprep.subr.bf16.mxu0 0
    %1899 = vmatpush2.bf16.msra.mxu0 0
    %1900 = vmatprep.subr.bf16.mxu0 0
    %1901 = vmatpush2.bf16.msra.mxu0 0
    %1902 = vmatprep.subr.bf16.mxu0 0
    %1903 = vmatpush2.bf16.msra.mxu0 0
    %1904 = vmatprep.subr.bf16.mxu0 0
    %1905 = vmatpush2.bf16.msra.mxu0 0
    %1906 = vmatprep.mubr.bf16.mxu0 0
    %1907 = vmatmul.mubr.bf16.gmra.mxu0 %v1771
    %v1908 = vpop.f32.mrf.mxu0
    %v1909 = vadd.f32 %v1860, %v1908
    %v1910 = vpop.f32.mrf.mxu0
    %v1911 = vpop.f32.mrf.mxu0
    %v1912 = vadd.f32 %v1863, %v1911
    %v1913 = vpop.f32.mrf.mxu0
    %1914 = vmatprep.mubr.bf16.mxu0 0
    %1915 = vmatmul.mubr.bf16.gmra.mxu0 %v1774
    %v1916 = vpop.f32.mrf.mxu0
    %v1917 = vadd.f32 %v1868, %v1916
    %v1918 = vpop.f32.mrf.mxu0
    %v1919 = vpop.f32.mrf.mxu0
    %v1920 = vadd.f32 %v1871, %v1919
    %v1921 = vpop.f32.mrf.mxu0
    %1922 = vdwg.mxu0
    %vm1923 = vcmp.ge.f32.partialorder %v1909, 0.0
    %vm1924 = vcmp.ge.f32.partialorder %v1912, 0.0
    %vm1925 = vcmp.ge.f32.partialorder %v1917, 0.0
    %vm1926 = vcmp.ge.f32.partialorder %v1920, 0.0
    %v1927 = vmul.f32 %v1909, 0.01
    %v1928 = vmul.f32 %v1912, 0.01
    %v1929 = vmul.f32 %v1917, 0.01
    %v1930 = vmul.f32 %v1920, 0.01
    %v1931 = vsel %vm1923, %v1909, %v1927
    %v1932 = vsel %vm1924, %v1912, %v1928
    %v1933 = vsel %vm1925, %v1917, %v1929
    %v1934 = vsel %vm1926, %v1920, %v1930
    %v1935 = vadd.f32 %v1931, %v1932
    %v1936 = vadd.f32 %v1935, %v1933
    %v1937 = vadd.f32 %v1936, %v1934
    %v1938 = vrot.slane %v1937, 4
    %v1939 = vadd.f32 %v1937, %v1938
    %v1940 = vrot.slane %v1939, 2
    %v1941 = vadd.f32 %v1939, %v1940
    %v1942 = vrot.slane %v1941, 1
    %v1943 = vadd.f32 %v1941, %v1942
    %v1944 = vmul.f32 %v1931, %v1931
    %v1945 = vmul.f32 %v1932, %v1932
    %v1946 = vmul.f32 %v1933, %v1933
    %v1947 = vmul.f32 %v1934, %v1934
    %v1948 = vadd.f32 %v1944, %v1945
    %v1949 = vadd.f32 %v1948, %v1946
    %v1950 = vadd.f32 %v1949, %v1947
    %v1951 = vrot.slane %v1950, 4
    %v1952 = vadd.f32 %v1950, %v1951
    %v1953 = vrot.slane %v1952, 2
    %v1954 = vadd.f32 %v1952, %v1953
    %v1955 = vrot.slane %v1954, 1
    %v1956 = vadd.f32 %v1954, %v1955
    %v1957 = vld [vmem:[%s8] sm:$0x1]
    %v1958 = vld [vmem:[%s9] sm:$0x1]
    %v1959 = vmul.f32 %v1943, 0.03125
    %v1960 = vmul.f32 %v1956, 0.03125
    %v1961 = vmul.f32 %v1959, %v1959
    %v1962 = vsub.f32 %v1960, %v1961
    %v1963 = vmax.f32 %v1962, 0.0
    %v1964 = vadd.f32 %v1963, 1e-05
    %v1965 = vrsqrt.pop %v1964
    %v1966 = vmul.f32 %v1957, %v1965
    %v1967 = vmul.f32 %v1959, %v1966
    %v1968 = vsub.f32 %v1958, %v1967
    %v1970 = vlaneseq
    %v1971 = vshrl.u32 %v1970, 7
    %v1972 = vsub.s32 0, %v1971
    %v1973 = vrot.slane %v1966, %v1972
    %v1975 = vmul.f32 %v1931, %v1973
    %v1977 = vlaneseq
    %v1978 = vshrl.u32 %v1977, 7
    %v1979 = vsub.s32 0, %v1978
    %v1980 = vrot.slane %v1968, %v1979
    %v1982 = vadd.f32 %v1975, %v1980
    %v1984 = vrot.slane %v1982, 2
    %v1986 = vmax.f32 %v1982, %v1984
    %v1987 = vmul.f32 %v1932, %v1973
    %v1988 = vadd.f32 %v1987, %v1980
    %v1990 = vrot.slane %v1988, 2
    %v1992 = vmax.f32 %v1988, %v1990
    %v1993 = vmax.f32 %v1986, %v1992
    %v1994 = vpack.c.bf16 %v1993, %v1993
    %v1995 = vld [vmem:[%s10] sm:$0xff]
    %v1996 = vld [vmem:[%s10 + $0x8] sm:$0xff]
    %v1997 = vld [vmem:[%s10 + $0x10] sm:$0xff]
    %v1998 = vld [vmem:[%s10 + $0x18] sm:$0xff]
    %v1999 = vld [vmem:[%s10 + $0x20] sm:$0xff]
    %v2000 = vld [vmem:[%s10 + $0x28] sm:$0xff]
    %v2001 = vld [vmem:[%s10 + $0x30] sm:$0xff]
    %v2002 = vld [vmem:[%s10 + $0x38] sm:$0xff]
    %v2003 = vld [vmem:[%s10 + $0x40] sm:$0xff]
    %v2004 = vld [vmem:[%s10 + $0x48] sm:$0xff]
    %v2005 = vld [vmem:[%s10 + $0x50] sm:$0xff]
    %v2006 = vld [vmem:[%s10 + $0x58] sm:$0xff]
    %v2007 = vld [vmem:[%s10 + $0x60] sm:$0xff]
    %v2008 = vld [vmem:[%s10 + $0x68] sm:$0xff]
    %v2009 = vld [vmem:[%s10 + $0x70] sm:$0xff]
    %v2010 = vld [vmem:[%s10 + $0x78] sm:$0xff]
    %v2011 = vld [vmem:[%s10 + $0x80] sm:$0xff]
    %v2012 = vld [vmem:[%s10 + $0x88] sm:$0xff]
    %v2013 = vld [vmem:[%s10 + $0x90] sm:$0xff]
    %v2014 = vld [vmem:[%s10 + $0x98] sm:$0xff]
    %v2015 = vld [vmem:[%s10 + $0xa0] sm:$0xff]
    %v2016 = vld [vmem:[%s10 + $0xa8] sm:$0xff]
    %v2017 = vld [vmem:[%s10 + $0xb0] sm:$0xff]
    %v2018 = vld [vmem:[%s10 + $0xb8] sm:$0xff]
    %v2019 = vld [vmem:[%s10 + $0xc0] sm:$0xff]
    %v2020 = vld [vmem:[%s10 + $0xc8] sm:$0xff]
    %v2021 = vld [vmem:[%s10 + $0xd0] sm:$0xff]
    %v2022 = vld [vmem:[%s10 + $0xd8] sm:$0xff]
    %v2023 = vld [vmem:[%s10 + $0xe0] sm:$0xff]
    %v2024 = vld [vmem:[%s10 + $0xe8] sm:$0xff]
    %v2025 = vld [vmem:[%s10 + $0xf0] sm:$0xff]
    %v2026 = vld [vmem:[%s10 + $0xf8] sm:$0xff]
    %v2027 = vld [vmem:[%s10 + $0x100] sm:$0xff]
    %v2028 = vld [vmem:[%s10 + $0x108] sm:$0xff]
    %v2029 = vld [vmem:[%s10 + $0x110] sm:$0xff]
    %v2030 = vld [vmem:[%s10 + $0x118] sm:$0xff]
    %v2031 = vld [vmem:[%s10 + $0x120] sm:$0xff]
    %v2032 = vld [vmem:[%s10 + $0x128] sm:$0xff]
    %v2033 = vld [vmem:[%s10 + $0x130] sm:$0xff]
    %v2034 = vld [vmem:[%s10 + $0x138] sm:$0xff]
    %v2035 = vld [vmem:[%s10 + $0x140] sm:$0xff]
    %v2036 = vld [vmem:[%s10 + $0x148] sm:$0xff]
    %v2037 = vld [vmem:[%s10 + $0x150] sm:$0xff]
    %v2038 = vld [vmem:[%s10 + $0x158] sm:$0xff]
    %v2039 = vld [vmem:[%s10 + $0x160] sm:$0xff]
    %v2040 = vld [vmem:[%s10 + $0x168] sm:$0xff]
    %v2041 = vld [vmem:[%s10 + $0x170] sm:$0xff]
    %v2042 = vld [vmem:[%s10 + $0x178] sm:$0xff]
    %v2043 = vld [vmem:[%s10 + $0x180] sm:$0xff]
    %v2044 = vld [vmem:[%s10 + $0x188] sm:$0xff]
    %v2045 = vld [vmem:[%s10 + $0x190] sm:$0xff]
    %v2046 = vld [vmem:[%s10 + $0x198] sm:$0xff]
    %v2047 = vld [vmem:[%s10 + $0x1a0] sm:$0xff]
    %v2048 = vld [vmem:[%s10 + $0x1a8] sm:$0xff]
    %v2049 = vld [vmem:[%s10 + $0x1b0] sm:$0xff]
    %v2050 = vld [vmem:[%s10 + $0x1b8] sm:$0xff]
    %v2051 = vld [vmem:[%s10 + $0x1c0] sm:$0xff]
    %v2052 = vld [vmem:[%s10 + $0x1c8] sm:$0xff]
    %v2053 = vld [vmem:[%s10 + $0x1d0] sm:$0xff]
    %v2054 = vld [vmem:[%s10 + $0x1d8] sm:$0xff]
    %v2055 = vld [vmem:[%s10 + $0x1e0] sm:$0xff]
    %v2056 = vld [vmem:[%s10 + $0x1e8] sm:$0xff]
    %v2057 = vld [vmem:[%s10 + $0x1f0] sm:$0xff]
    %v2058 = vld [vmem:[%s10 + $0x1f8] sm:$0xff]
    %v2123 = vunpack.c.l.b16 %v1995
    %v2124 = vunpack.c.h.b16 %v1995
    %v2125 = vunpack.c.l.b16 %v1996
    %v2126 = vunpack.c.h.b16 %v1996
    %v2127 = vunpack.c.l.b16 %v1997
    %v2128 = vunpack.c.h.b16 %v1997
    %v2129 = vunpack.c.l.b16 %v1998
    %v2130 = vunpack.c.h.b16 %v1998
    %v2131 = vunpack.c.l.b16 %v1999
    %v2132 = vunpack.c.h.b16 %v1999
    %v2133 = vunpack.c.l.b16 %v2000
    %v2134 = vunpack.c.h.b16 %v2000
    %v2135 = vunpack.c.l.b16 %v2001
    %v2136 = vunpack.c.h.b16 %v2001
    %v2137 = vunpack.c.l.b16 %v2002
    %v2138 = vunpack.c.h.b16 %v2002
    %v2139 = vunpack.c.l.b16 %v2003
    %v2140 = vunpack.c.h.b16 %v2003
    %v2141 = vunpack.c.l.b16 %v2004
    %v2142 = vunpack.c.h.b16 %v2004
    %v2143 = vunpack.c.l.b16 %v2005
    %v2144 = vunpack.c.h.b16 %v2005
    %v2145 = vunpack.c.l.b16 %v2006
    %v2146 = vunpack.c.h.b16 %v2006
    %v2147 = vunpack.c.l.b16 %v2007
    %v2148 = vunpack.c.h.b16 %v2007
    %v2149 = vunpack.c.l.b16 %v2008
    %v2150 = vunpack.c.h.b16 %v2008
    %v2151 = vunpack.c.l.b16 %v2009
    %v2152 = vunpack.c.h.b16 %v2009
    %v2153 = vunpack.c.l.b16 %v2010
    %v2154 = vunpack.c.h.b16 %v2010
    %v2155 = vunpack.c.l.b16 %v2011
    %v2156 = vunpack.c.h.b16 %v2011
    %v2157 = vunpack.c.l.b16 %v2012
    %v2158 = vunpack.c.h.b16 %v2012
    %v2159 = vunpack.c.l.b16 %v2013
    %v2160 = vunpack.c.h.b16 %v2013
    %v2161 = vunpack.c.l.b16 %v2014
    %v2162 = vunpack.c.h.b16 %v2014
    %v2163 = vunpack.c.l.b16 %v2015
    %v2164 = vunpack.c.h.b16 %v2015
    %v2165 = vunpack.c.l.b16 %v2016
    %v2166 = vunpack.c.h.b16 %v2016
    %v2167 = vunpack.c.l.b16 %v2017
    %v2168 = vunpack.c.h.b16 %v2017
    %v2169 = vunpack.c.l.b16 %v2018
    %v2170 = vunpack.c.h.b16 %v2018
    %v2171 = vunpack.c.l.b16 %v2019
    %v2172 = vunpack.c.h.b16 %v2019
    %v2173 = vunpack.c.l.b16 %v2020
    %v2174 = vunpack.c.h.b16 %v2020
    %v2175 = vunpack.c.l.b16 %v2021
    %v2176 = vunpack.c.h.b16 %v2021
    %v2177 = vunpack.c.l.b16 %v2022
    %v2178 = vunpack.c.h.b16 %v2022
    %v2179 = vunpack.c.l.b16 %v2023
    %v2180 = vunpack.c.h.b16 %v2023
    %v2181 = vunpack.c.l.b16 %v2024
    %v2182 = vunpack.c.h.b16 %v2024
    %v2183 = vunpack.c.l.b16 %v2025
    %v2184 = vunpack.c.h.b16 %v2025
    %v2185 = vunpack.c.l.b16 %v2026
    %v2186 = vunpack.c.h.b16 %v2026
    %v2187 = vunpack.c.l.b16 %v2027
    %v2188 = vunpack.c.h.b16 %v2027
    %v2189 = vunpack.c.l.b16 %v2028
    %v2190 = vunpack.c.h.b16 %v2028
    %v2191 = vunpack.c.l.b16 %v2029
    %v2192 = vunpack.c.h.b16 %v2029
    %v2193 = vunpack.c.l.b16 %v2030
    %v2194 = vunpack.c.h.b16 %v2030
    %v2195 = vunpack.c.l.b16 %v2031
    %v2196 = vunpack.c.h.b16 %v2031
    %v2197 = vunpack.c.l.b16 %v2032
    %v2198 = vunpack.c.h.b16 %v2032
    %v2199 = vunpack.c.l.b16 %v2033
    %v2200 = vunpack.c.h.b16 %v2033
    %v2201 = vunpack.c.l.b16 %v2034
    %v2202 = vunpack.c.h.b16 %v2034
    %v2203 = vunpack.c.l.b16 %v2035
    %v2204 = vunpack.c.h.b16 %v2035
    %v2205 = vunpack.c.l.b16 %v2036
    %v2206 = vunpack.c.h.b16 %v2036
    %v2207 = vunpack.c.l.b16 %v2037
    %v2208 = vunpack.c.h.b16 %v2037
    %v2209 = vunpack.c.l.b16 %v2038
    %v2210 = vunpack.c.h.b16 %v2038
    %v2211 = vunpack.c.l.b16 %v2039
    %v2212 = vunpack.c.h.b16 %v2039
    %v2213 = vunpack.c.l.b16 %v2040
    %v2214 = vunpack.c.h.b16 %v2040
    %v2215 = vunpack.c.l.b16 %v2041
    %v2216 = vunpack.c.h.b16 %v2041
    %v2217 = vunpack.c.l.b16 %v2042
    %v2218 = vunpack.c.h.b16 %v2042
    %v2219 = vunpack.c.l.b16 %v2043
    %v2220 = vunpack.c.h.b16 %v2043
    %v2221 = vunpack.c.l.b16 %v2044
    %v2222 = vunpack.c.h.b16 %v2044
    %v2223 = vunpack.c.l.b16 %v2045
    %v2224 = vunpack.c.h.b16 %v2045
    %v2225 = vunpack.c.l.b16 %v2046
    %v2226 = vunpack.c.h.b16 %v2046
    %v2227 = vunpack.c.l.b16 %v2047
    %v2228 = vunpack.c.h.b16 %v2047
    %v2229 = vunpack.c.l.b16 %v2048
    %v2230 = vunpack.c.h.b16 %v2048
    %v2231 = vunpack.c.l.b16 %v2049
    %v2232 = vunpack.c.h.b16 %v2049
    %v2233 = vunpack.c.l.b16 %v2050
    %v2234 = vunpack.c.h.b16 %v2050
    %v2235 = vunpack.c.l.b16 %v2051
    %v2236 = vunpack.c.h.b16 %v2051
    %v2237 = vunpack.c.l.b16 %v2052
    %v2238 = vunpack.c.h.b16 %v2052
    %v2239 = vunpack.c.l.b16 %v2053
    %v2240 = vunpack.c.h.b16 %v2053
    %v2241 = vunpack.c.l.b16 %v2054
    %v2242 = vunpack.c.h.b16 %v2054
    %v2243 = vunpack.c.l.b16 %v2055
    %v2244 = vunpack.c.h.b16 %v2055
    %v2245 = vunpack.c.l.b16 %v2056
    %v2246 = vunpack.c.h.b16 %v2056
    %v2247 = vunpack.c.l.b16 %v2057
    %v2248 = vunpack.c.h.b16 %v2057
    %v2249 = vunpack.c.l.b16 %v2058
    %v2250 = vunpack.c.h.b16 %v2058
    %v2251 = vpack.c.b16 %v2131, %v2123
    %v2252 = vpack.c.b16 %v2132, %v2124
    %v2253 = vpack.c.b16 %v2133, %v2125
    %v2254 = vpack.c.b16 %v2134, %v2126
    %v2255 = vpack.c.b16 %v2135, %v2127
    %v2256 = vpack.c.b16 %v2136, %v2128
    %v2257 = vpack.c.b16 %v2137, %v2129
    %v2258 = vpack.c.b16 %v2138, %v2130
    %v2259 = vpack.c.b16 %v2147, %v2139
    %v2260 = vpack.c.b16 %v2148, %v2140
    %v2261 = vpack.c.b16 %v2149, %v2141
    %v2262 = vpack.c.b16 %v2150, %v2142
    %v2263 = vpack.c.b16 %v2151, %v2143
    %v2264 = vpack.c.b16 %v2152, %v2144
    %v2265 = vpack.c.b16 %v2153, %v2145
    %v2266 = vpack.c.b16 %v2154, %v2146
    %v2267 = vpack.c.b16 %v2163, %v2155
    %v2268 = vpack.c.b16 %v2164, %v2156
    %v2269 = vpack.c.b16 %v2165, %v2157
    %v2270 = vpack.c.b16 %v2166, %v2158
    %v2271 = vpack.c.b16 %v2167, %v2159
    %v2272 = vpack.c.b16 %v2168, %v2160
    %v2273 = vpack.c.b16 %v2169, %v2161
    %v2274 = vpack.c.b16 %v2170, %v2162
    %v2275 = vpack.c.b16 %v2179, %v2171
    %v2276 = vpack.c.b16 %v2180, %v2172
    %v2277 = vpack.c.b16 %v2181, %v2173
    %v2278 = vpack.c.b16 %v2182, %v2174
    %v2279 = vpack.c.b16 %v2183, %v2175
    %v2280 = vpack.c.b16 %v2184, %v2176
    %v2281 = vpack.c.b16 %v2185, %v2177
    %v2282 = vpack.c.b16 %v2186, %v2178
    %v2283 = vpack.c.b16 %v2195, %v2187
    %v2284 = vpack.c.b16 %v2196, %v2188
    %v2285 = vpack.c.b16 %v2197, %v2189
    %v2286 = vpack.c.b16 %v2198, %v2190
    %v2287 = vpack.c.b16 %v2199, %v2191
    %v2288 = vpack.c.b16 %v2200, %v2192
    %v2289 = vpack.c.b16 %v2201, %v2193
    %v2290 = vpack.c.b16 %v2202, %v2194
    %v2291 = vpack.c.b16 %v2211, %v2203
    %v2292 = vpack.c.b16 %v2212, %v2204
    %v2293 = vpack.c.b16 %v2213, %v2205
    %v2294 = vpack.c.b16 %v2214, %v2206
    %v2295 = vpack.c.b16 %v2215, %v2207
    %v2296 = vpack.c.b16 %v2216, %v2208
    %v2297 = vpack.c.b16 %v2217, %v2209
    %v2298 = vpack.c.b16 %v2218, %v2210
    %v2299 = vpack.c.b16 %v2227, %v2219
    %v2300 = vpack.c.b16 %v2228, %v2220
    %v2301 = vpack.c.b16 %v2229, %v2221
    %v2302 = vpack.c.b16 %v2230, %v2222
    %v2303 = vpack.c.b16 %v2231, %v2223
    %v2304 = vpack.c.b16 %v2232, %v2224
    %v2305 = vpack.c.b16 %v2233, %v2225
    %v2306 = vpack.c.b16 %v2234, %v2226
    %v2307 = vpack.c.b16 %v2243, %v2235
    %v2308 = vpack.c.b16 %v2244, %v2236
    %v2309 = vpack.c.b16 %v2245, %v2237
    %v2310 = vpack.c.b16 %v2246, %v2238
    %v2311 = vpack.c.b16 %v2247, %v2239
    %v2312 = vpack.c.b16 %v2248, %v2240
    %v2313 = vpack.c.b16 %v2249, %v2241
    %v2314 = vpack.c.b16 %v2250, %v2242
    %2379 = vmatprep.subr.bf16.mxu0 %v2308
    %2380 = vmatpush1.bf16.msra.mxu0 %v2307
    %2381 = vmatprep.subr.bf16.mxu0 %v2300
    %2382 = vmatpush1.bf16.msra.mxu0 %v2299
    %2383 = vmatprep.subr.bf16.mxu0 %v2292
    %2384 = vmatpush1.bf16.msra.mxu0 %v2291
    %2385 = vmatprep.subr.bf16.mxu0 %v2284
    %2386 = vmatpush1.bf16.msra.mxu0 %v2283
    %2387 = vmatprep.subr.bf16.mxu0 %v2276
    %2388 = vmatpush1.bf16.msra.mxu0 %v2275
    %2389 = vmatprep.subr.bf16.mxu0 %v2268
    %2390 = vmatpush1.bf16.msra.mxu0 %v2267
    %2391 = vmatprep.subr.bf16.mxu0 %v2260
    %2392 = vmatpush1.bf16.msra.mxu0 %v2259
    %2393 = vmatprep.subr.bf16.mxu0 %v2252
    %2394 = vmatpush1.bf16.msra.mxu0 %v2251
    %2395 = vmatprep.subr.bf16.mxu0 0
    %2396 = vmatpush2.bf16.msra.mxu0 0
    %2397 = vmatprep.subr.bf16.mxu0 0
    %2398 = vmatpush2.bf16.msra.mxu0 0
    %2399 = vmatprep.subr.bf16.mxu0 0
    %2400 = vmatpush2.bf16.msra.mxu0 0
    %2401 = vmatprep.subr.bf16.mxu0 0
    %2402 = vmatpush2.bf16.msra.mxu0 0
    %2403 = vmatprep.subr.bf16.mxu0 0
    %2404 = vmatpush2.bf16.msra.mxu0 0
    %2405 = vmatprep.subr.bf16.mxu0 0
    %2406 = vmatpush2.bf16.msra.mxu0 0
    %2407 = vmatprep.subr.bf16.mxu0 0
    %2408 = vmatpush2.bf16.msra.mxu0 0
    %2409 = vmatprep.subr.bf16.mxu0 0
    %2410 = vmatpush2.bf16.msra.mxu0 0
    %2411 = vmatprep.mubr.bf16.mxu0 0
    %2412 = vmatmul.mubr.bf16.gmra.mxu0 %v1994
    %v2413 = vpop.f32.mrf.mxu0
    %v2414 = vadd.f32 0.0, %v2413
    %v2415 = vpop.f32.mrf.mxu0
    %v2416 = vadd.f32 0.0, %v2415
    %v2417 = vpop.f32.mrf.mxu0
    %v2418 = vpop.f32.mrf.mxu0
    %2419 = vdwg.mxu0
    %2420 = vmatprep.subr.bf16.mxu0 %v2310
    %2421 = vmatpush1.bf16.msra.mxu0 %v2309
    %2422 = vmatprep.subr.bf16.mxu0 %v2302
    %2423 = vmatpush1.bf16.msra.mxu0 %v2301
    %2424 = vmatprep.subr.bf16.mxu0 %v2294
    %2425 = vmatpush1.bf16.msra.mxu0 %v2293
    %2426 = vmatprep.subr.bf16.mxu0 %v2286
    %2427 = vmatpush1.bf16.msra.mxu0 %v2285
    %2428 = vmatprep.subr.bf16.mxu0 %v2278
    %2429 = vmatpush1.bf16.msra.mxu0 %v2277
    %2430 = vmatprep.subr.bf16.mxu0 %v2270
    %2431 = vmatpush1.bf16.msra.mxu0 %v2269
    %2432 = vmatprep.subr.bf16.mxu0 %v2262
    %2433 = vmatpush1.bf16.msra.mxu0 %v2261
    %2434 = vmatprep.subr.bf16.mxu0 %v2254
    %2435 = vmatpush1.bf16.msra.mxu0 %v2253
    %2436 = vmatprep.subr.bf16.mxu0 0
    %2437 = vmatpush2.bf16.msra.mxu0 0
    %2438 = vmatprep.subr.bf16.mxu0 0
    %2439 = vmatpush2.bf16.msra.mxu0 0
    %2440 = vmatprep.subr.bf16.mxu0 0
    %2441 = vmatpush2.bf16.msra.mxu0 0
    %2442 = vmatprep.subr.bf16.mxu0 0
    %2443 = vmatpush2.bf16.msra.mxu0 0
    %2444 = vmatprep.subr.bf16.mxu0 0
    %2445 = vmatpush2.bf16.msra.mxu0 0
    %2446 = vmatprep.subr.bf16.mxu0 0
    %2447 = vmatpush2.bf16.msra.mxu0 0
    %2448 = vmatprep.subr.bf16.mxu0 0
    %2449 = vmatpush2.bf16.msra.mxu0 0
    %2450 = vmatprep.subr.bf16.mxu0 0
    %2451 = vmatpush2.bf16.msra.mxu0 0
    %2452 = vmatprep.mubr.bf16.mxu0 0
    %2453 = vmatmul.mubr.bf16.gmra.mxu0 %v1994
    %v2454 = vpop.f32.mrf.mxu0
    %v2455 = vadd.f32 0.0, %v2454
    %v2456 = vpop.f32.mrf.mxu0
    %v2457 = vadd.f32 0.0, %v2456
    %v2458 = vpop.f32.mrf.mxu0
    %v2459 = vpop.f32.mrf.mxu0
    %2460 = vdwg.mxu0
    %2461 = vmatprep.subr.bf16.mxu0 %v2312
    %2462 = vmatpush1.bf16.msra.mxu0 %v2311
    %2463 = vmatprep.subr.bf16.mxu0 %v2304
    %2464 = vmatpush1.bf16.msra.mxu0 %v2303
    %2465 = vmatprep.subr.bf16.mxu0 %v2296
    %2466 = vmatpush1.bf16.msra.mxu0 %v2295
    %2467 = vmatprep.subr.bf16.mxu0 %v2288
    %2468 = vmatpush1.bf16.msra.mxu0 %v2287
    %2469 = vmatprep.subr.bf16.mxu0 %v2280
    %2470 = vmatpush1.bf16.msra.mxu0 %v2279
    %2471 = vmatprep.subr.bf16.mxu0 %v2272
    %2472 = vmatpush1.bf16.msra.mxu0 %v2271
    %2473 = vmatprep.subr.bf16.mxu0 %v2264
    %2474 = vmatpush1.bf16.msra.mxu0 %v2263
    %2475 = vmatprep.subr.bf16.mxu0 %v2256
    %2476 = vmatpush1.bf16.msra.mxu0 %v2255
    %2477 = vmatprep.subr.bf16.mxu0 0
    %2478 = vmatpush2.bf16.msra.mxu0 0
    %2479 = vmatprep.subr.bf16.mxu0 0
    %2480 = vmatpush2.bf16.msra.mxu0 0
    %2481 = vmatprep.subr.bf16.mxu0 0
    %2482 = vmatpush2.bf16.msra.mxu0 0
    %2483 = vmatprep.subr.bf16.mxu0 0
    %2484 = vmatpush2.bf16.msra.mxu0 0
    %2485 = vmatprep.subr.bf16.mxu0 0
    %2486 = vmatpush2.bf16.msra.mxu0 0
    %2487 = vmatprep.subr.bf16.mxu0 0
    %2488 = vmatpush2.bf16.msra.mxu0 0
    %2489 = vmatprep.subr.bf16.mxu0 0
    %2490 = vmatpush2.bf16.msra.mxu0 0
    %2491 = vmatprep.subr.bf16.mxu0 0
    %2492 = vmatpush2.bf16.msra.mxu0 0
    %2493 = vmatprep.mubr.bf16.mxu0 0
    %2494 = vmatmul.mubr.bf16.gmra.mxu0 %v1994
    %v2495 = vpop.f32.mrf.mxu0
    %v2496 = vadd.f32 0.0, %v2495
    %v2497 = vpop.f32.mrf.mxu0
    %v2498 = vadd.f32 0.0, %v2497
    %v2499 = vpop.f32.mrf.mxu0
    %v2500 = vpop.f32.mrf.mxu0
    %2501 = vdwg.mxu0
    %2502 = vmatprep.subr.bf16.mxu0 %v2314
    %2503 = vmatpush1.bf16.msra.mxu0 %v2313
    %2504 = vmatprep.subr.bf16.mxu0 %v2306
    %2505 = vmatpush1.bf16.msra.mxu0 %v2305
    %2506 = vmatprep.subr.bf16.mxu0 %v2298
    %2507 = vmatpush1.bf16.msra.mxu0 %v2297
    %2508 = vmatprep.subr.bf16.mxu0 %v2290
    %2509 = vmatpush1.bf16.msra.mxu0 %v2289
    %2510 = vmatprep.subr.bf16.mxu0 %v2282
    %2511 = vmatpush1.bf16.msra.mxu0 %v2281
    %2512 = vmatprep.subr.bf16.mxu0 %v2274
    %2513 = vmatpush1.bf16.msra.mxu0 %v2273
    %2514 = vmatprep.subr.bf16.mxu0 %v2266
    %2515 = vmatpush1.bf16.msra.mxu0 %v2265
    %2516 = vmatprep.subr.bf16.mxu0 %v2258
    %2517 = vmatpush1.bf16.msra.mxu0 %v2257
    %2518 = vmatprep.subr.bf16.mxu0 0
    %2519 = vmatpush2.bf16.msra.mxu0 0
    %2520 = vmatprep.subr.bf16.mxu0 0
    %2521 = vmatpush2.bf16.msra.mxu0 0
    %2522 = vmatprep.subr.bf16.mxu0 0
    %2523 = vmatpush2.bf16.msra.mxu0 0
    %2524 = vmatprep.subr.bf16.mxu0 0
    %2525 = vmatpush2.bf16.msra.mxu0 0
    %2526 = vmatprep.subr.bf16.mxu0 0
    %2527 = vmatpush2.bf16.msra.mxu0 0
    %2528 = vmatprep.subr.bf16.mxu0 0
    %2529 = vmatpush2.bf16.msra.mxu0 0
    %2530 = vmatprep.subr.bf16.mxu0 0
    %2531 = vmatpush2.bf16.msra.mxu0 0
    %2532 = vmatprep.subr.bf16.mxu0 0
    %2533 = vmatpush2.bf16.msra.mxu0 0
    %2534 = vmatprep.mubr.bf16.mxu0 0
    %2535 = vmatmul.mubr.bf16.gmra.mxu0 %v1994
    %v2536 = vpop.f32.mrf.mxu0
    %v2537 = vadd.f32 0.0, %v2536
    %v2538 = vpop.f32.mrf.mxu0
    %v2539 = vadd.f32 0.0, %v2538
    %v2540 = vpop.f32.mrf.mxu0
    %v2541 = vpop.f32.mrf.mxu0
    %2542 = vdwg.mxu0
    %v2543 = vld [vmem:[%s11] sm:$0x3]
    %v2545 = vlaneseq
    %v2546 = vshrl.u32 %v2545, 7
    %v2547 = vsub.s32 0, %v2546
    %v2548 = vrot.slane %v2543, %v2547
    %v2549 = vlaneseq
    %v2550 = vshrl.u32 %v2549, 7
    %v2551 = vsub.s32 1, %v2550
    %v2552 = vrot.slane %v2543, %v2551
    %v2555 = vadd.f32 %v2414, %v2548
    %v2556 = vadd.f32 %v2416, %v2552
    %vm2557 = vcmp.ge.f32.partialorder %v2555, 0.0
    %vm2558 = vcmp.ge.f32.partialorder %v2556, 0.0
    %v2559 = vmul.f32 %v2555, 0.01
    %v2560 = vmul.f32 %v2556, 0.01
    %v2561 = vsel %vm2557, %v2555, %v2559
    %v2562 = vsel %vm2558, %v2556, %v2560
    %v2563 = vadd.f32 %v2455, %v2548
    %v2564 = vadd.f32 %v2457, %v2552
    %vm2565 = vcmp.ge.f32.partialorder %v2563, 0.0
    %vm2566 = vcmp.ge.f32.partialorder %v2564, 0.0
    %v2567 = vmul.f32 %v2563, 0.01
    %v2568 = vmul.f32 %v2564, 0.01
    %v2569 = vsel %vm2565, %v2563, %v2567
    %v2570 = vsel %vm2566, %v2564, %v2568
    %v2571 = vadd.f32 %v2496, %v2548
    %v2572 = vadd.f32 %v2498, %v2552
    %vm2573 = vcmp.ge.f32.partialorder %v2571, 0.0
    %vm2574 = vcmp.ge.f32.partialorder %v2572, 0.0
    %v2575 = vmul.f32 %v2571, 0.01
    %v2576 = vmul.f32 %v2572, 0.01
    %v2577 = vsel %vm2573, %v2571, %v2575
    %v2578 = vsel %vm2574, %v2572, %v2576
    %v2579 = vadd.f32 %v2537, %v2548
    %v2580 = vadd.f32 %v2539, %v2552
    %vm2581 = vcmp.ge.f32.partialorder %v2579, 0.0
    %vm2582 = vcmp.ge.f32.partialorder %v2580, 0.0
    %v2583 = vmul.f32 %v2579, 0.01
    %v2584 = vmul.f32 %v2580, 0.01
    %v2585 = vsel %vm2581, %v2579, %v2583
    %v2586 = vsel %vm2582, %v2580, %v2584
    %v2587 = vsel %vm1162, %v2561, 0.0
    %v2588 = vrot.slane %v2587, 4
    %v2589 = vadd.f32 %v2587, %v2588
    %v2590 = vrot.slane %v2589, 2
    %v2591 = vadd.f32 %v2589, %v2590
    %v2592 = vrot.slane %v2591, 1
    %v2593 = vadd.f32 %v2591, %v2592
    %v2594 = vsel %vm1162, %v2562, 0.0
    %v2595 = vrot.slane %v2594, 4
    %v2596 = vadd.f32 %v2594, %v2595
    %v2597 = vrot.slane %v2596, 2
    %v2598 = vadd.f32 %v2596, %v2597
    %v2599 = vrot.slane %v2598, 1
    %v2600 = vadd.f32 %v2598, %v2599
    %v2601 = vmul.f32 %v2561, %v2561
    %v2602 = vmul.f32 %v2562, %v2562
    %v2603 = vsel %vm1162, %v2601, 0.0
    %v2604 = vrot.slane %v2603, 4
    %v2605 = vadd.f32 %v2603, %v2604
    %v2606 = vrot.slane %v2605, 2
    %v2607 = vadd.f32 %v2605, %v2606
    %v2608 = vrot.slane %v2607, 1
    %v2609 = vadd.f32 %v2607, %v2608
    %v2610 = vsel %vm1162, %v2602, 0.0
    %v2611 = vrot.slane %v2610, 4
    %v2612 = vadd.f32 %v2610, %v2611
    %v2613 = vrot.slane %v2612, 2
    %v2614 = vadd.f32 %v2612, %v2613
    %v2615 = vrot.slane %v2614, 1
    %v2616 = vadd.f32 %v2614, %v2615
    %v2617 = vsel %vm1162, %v2569, 0.0
    %v2618 = vrot.slane %v2617, 4
    %v2619 = vadd.f32 %v2617, %v2618
    %v2620 = vrot.slane %v2619, 2
    %v2621 = vadd.f32 %v2619, %v2620
    %v2622 = vrot.slane %v2621, 1
    %v2623 = vadd.f32 %v2621, %v2622
    %v2624 = vsel %vm1162, %v2570, 0.0
    %v2625 = vrot.slane %v2624, 4
    %v2626 = vadd.f32 %v2624, %v2625
    %v2627 = vrot.slane %v2626, 2
    %v2628 = vadd.f32 %v2626, %v2627
    %v2629 = vrot.slane %v2628, 1
    %v2630 = vadd.f32 %v2628, %v2629
    %v2631 = vmul.f32 %v2569, %v2569
    %v2632 = vmul.f32 %v2570, %v2570
    %v2633 = vsel %vm1162, %v2631, 0.0
    %v2634 = vrot.slane %v2633, 4
    %v2635 = vadd.f32 %v2633, %v2634
    %v2636 = vrot.slane %v2635, 2
    %v2637 = vadd.f32 %v2635, %v2636
    %v2638 = vrot.slane %v2637, 1
    %v2639 = vadd.f32 %v2637, %v2638
    %v2640 = vsel %vm1162, %v2632, 0.0
    %v2641 = vrot.slane %v2640, 4
    %v2642 = vadd.f32 %v2640, %v2641
    %v2643 = vrot.slane %v2642, 2
    %v2644 = vadd.f32 %v2642, %v2643
    %v2645 = vrot.slane %v2644, 1
    %v2646 = vadd.f32 %v2644, %v2645
    %v2647 = vadd.f32 %v2593, %v2623
    %v2648 = vadd.f32 %v2600, %v2630
    %v2649 = vadd.f32 %v2609, %v2639
    %v2650 = vadd.f32 %v2616, %v2646
    %v2651 = vsel %vm1162, %v2577, 0.0
    %v2652 = vrot.slane %v2651, 4
    %v2653 = vadd.f32 %v2651, %v2652
    %v2654 = vrot.slane %v2653, 2
    %v2655 = vadd.f32 %v2653, %v2654
    %v2656 = vrot.slane %v2655, 1
    %v2657 = vadd.f32 %v2655, %v2656
    %v2658 = vsel %vm1162, %v2578, 0.0
    %v2659 = vrot.slane %v2658, 4
    %v2660 = vadd.f32 %v2658, %v2659
    %v2661 = vrot.slane %v2660, 2
    %v2662 = vadd.f32 %v2660, %v2661
    %v2663 = vrot.slane %v2662, 1
    %v2664 = vadd.f32 %v2662, %v2663
    %v2665 = vmul.f32 %v2577, %v2577
    %v2666 = vmul.f32 %v2578, %v2578
    %v2667 = vsel %vm1162, %v2665, 0.0
    %v2668 = vrot.slane %v2667, 4
    %v2669 = vadd.f32 %v2667, %v2668
    %v2670 = vrot.slane %v2669, 2
    %v2671 = vadd.f32 %v2669, %v2670
    %v2672 = vrot.slane %v2671, 1
    %v2673 = vadd.f32 %v2671, %v2672
    %v2674 = vsel %vm1162, %v2666, 0.0
    %v2675 = vrot.slane %v2674, 4
    %v2676 = vadd.f32 %v2674, %v2675
    %v2677 = vrot.slane %v2676, 2
    %v2678 = vadd.f32 %v2676, %v2677
    %v2679 = vrot.slane %v2678, 1
    %v2680 = vadd.f32 %v2678, %v2679
    %v2681 = vadd.f32 %v2647, %v2657
    %v2682 = vadd.f32 %v2648, %v2664
    %v2683 = vadd.f32 %v2649, %v2673
    %v2684 = vadd.f32 %v2650, %v2680
    %v2685 = vsel %vm1162, %v2585, 0.0
    %v2686 = vrot.slane %v2685, 4
    %v2687 = vadd.f32 %v2685, %v2686
    %v2688 = vrot.slane %v2687, 2
    %v2689 = vadd.f32 %v2687, %v2688
    %v2690 = vrot.slane %v2689, 1
    %v2691 = vadd.f32 %v2689, %v2690
    %v2692 = vsel %vm1162, %v2586, 0.0
    %v2693 = vrot.slane %v2692, 4
    %v2694 = vadd.f32 %v2692, %v2693
    %v2695 = vrot.slane %v2694, 2
    %v2696 = vadd.f32 %v2694, %v2695
    %v2697 = vrot.slane %v2696, 1
    %v2698 = vadd.f32 %v2696, %v2697
    %v2699 = vmul.f32 %v2585, %v2585
    %v2700 = vmul.f32 %v2586, %v2586
    %v2701 = vsel %vm1162, %v2699, 0.0
    %v2702 = vrot.slane %v2701, 4
    %v2703 = vadd.f32 %v2701, %v2702
    %v2704 = vrot.slane %v2703, 2
    %v2705 = vadd.f32 %v2703, %v2704
    %v2706 = vrot.slane %v2705, 1
    %v2707 = vadd.f32 %v2705, %v2706
    %v2708 = vsel %vm1162, %v2700, 0.0
    %v2709 = vrot.slane %v2708, 4
    %v2710 = vadd.f32 %v2708, %v2709
    %v2711 = vrot.slane %v2710, 2
    %v2712 = vadd.f32 %v2710, %v2711
    %v2713 = vrot.slane %v2712, 1
    %v2714 = vadd.f32 %v2712, %v2713
    %v2715 = vadd.f32 %v2681, %v2691
    %v2716 = vadd.f32 %v2682, %v2698
    %v2717 = vadd.f32 %v2683, %v2707
    %v2718 = vadd.f32 %v2684, %v2714
    %v2719 = vld [vmem:[%s12] sm:$0x3]
    %v2720 = vld [vmem:[%s13] sm:$0x3]
    %v2721 = vmul.f32 %v2715, 0.125
    %v2722 = vmul.f32 %v2716, 0.125
    %v2723 = vmul.f32 %v2717, 0.125
    %v2724 = vmul.f32 %v2718, 0.125
    %v2725 = vmul.f32 %v2721, %v2721
    %v2726 = vmul.f32 %v2722, %v2722
    %v2727 = vsub.f32 %v2723, %v2725
    %v2728 = vsub.f32 %v2724, %v2726
    %v2729 = vmax.f32 %v2727, 0.0
    %v2730 = vmax.f32 %v2728, 0.0
    %v2731 = vadd.f32 %v2729, 1e-05
    %v2732 = vadd.f32 %v2730, 1e-05
    %v2733 = vrsqrt.pop %v2731
    %v2734 = vrsqrt.pop %v2732
    %v2737 = vcombine.low %v2733, %v2734
    %v2739 = vunpack.c.l.s4 1966171168
    %v2740 = vunpack.c.0.s8 %v2739
    %v2741 = vlaneseq
    %v2742 = vshrl.u32 %v2741, 7
    %v2743 = vsub.s32 %v2740, %v2742
    %v2744 = vrot.slane %v2737, %v2743
    %v2746 = vunpack.c.l.s4 1966171168
    %v2747 = vunpack.c.0.s8 %v2746
    %v2748 = vlaneseq
    %v2749 = vshrl.u32 %v2748, 7
    %v2750 = vsub.s32 %v2747, %v2749
    %v2751 = vrot.slane %v2744, %v2750
    %v2753 = vmul.f32 %v2719, %v2751
    %v2755 = vlaneseq
    %v2756 = vshrl.u32 %v2755, 7
    %v2757 = vsub.s32 0, %v2756
    %v2758 = vrot.slane %v2753, %v2757
    %v2759 = vlaneseq
    %v2760 = vshrl.u32 %v2759, 7
    %v2761 = vsub.s32 1, %v2760
    %v2762 = vrot.slane %v2753, %v2761
    %v2765 = vmul.f32 %v2721, %v2758
    %v2766 = vmul.f32 %v2722, %v2762
    %v2769 = vcombine.low %v2765, %v2766
    %v2771 = vunpack.c.l.s4 1966171168
    %v2772 = vunpack.c.0.s8 %v2771
    %v2773 = vlaneseq
    %v2774 = vshrl.u32 %v2773, 7
    %v2775 = vsub.s32 %v2772, %v2774
    %v2776 = vrot.slane %v2769, %v2775
    %v2778 = vunpack.c.l.s4 1966171168
    %v2779 = vunpack.c.0.s8 %v2778
    %v2780 = vlaneseq
    %v2781 = vshrl.u32 %v2780, 7
    %v2782 = vsub.s32 %v2779, %v2781
    %v2783 = vrot.slane %v2776, %v2782
    %v2785 = vsub.f32 %v2720, %v2783
    %v2786 = vmul.f32 %v2561, %v2758
    %v2787 = vmul.f32 %v2562, %v2762
    %v2789 = vlaneseq
    %v2790 = vshrl.u32 %v2789, 7
    %v2791 = vsub.s32 0, %v2790
    %v2792 = vrot.slane %v2785, %v2791
    %v2793 = vlaneseq
    %v2794 = vshrl.u32 %v2793, 7
    %v2795 = vsub.s32 1, %v2794
    %v2796 = vrot.slane %v2785, %v2795
    %v2799 = vadd.f32 %v2786, %v2792
    %v2800 = vadd.f32 %v2787, %v2796
    %v2801 = vmul.f32 %v2569, %v2758
    %v2802 = vmul.f32 %v2570, %v2762
    %v2803 = vadd.f32 %v2801, %v2792
    %v2804 = vadd.f32 %v2802, %v2796
    %v2805 = vmax.f32 %v2799, %v2803
    %v2806 = vmax.f32 %v2800, %v2804
    %v2807 = vmul.f32 %v2577, %v2758
    %v2808 = vmul.f32 %v2578, %v2762
    %v2809 = vadd.f32 %v2807, %v2792
    %v2810 = vadd.f32 %v2808, %v2796
    %v2811 = vmax.f32 %v2805, %v2809
    %v2812 = vmax.f32 %v2806, %v2810
    %v2813 = vmul.f32 %v2585, %v2758
    %v2814 = vmul.f32 %v2586, %v2762
    %v2815 = vadd.f32 %v2813, %v2792
    %v2816 = vadd.f32 %v2814, %v2796
    %v2817 = vmax.f32 %v2811, %v2815
    %v2818 = vmax.f32 %v2812, %v2816
    %v2819 = vpack.c.bf16 %v2817, %v2817
    %v2820 = vpack.c.bf16 %v2818, %v2818
    %v2821 = vld [vmem:[%s14] sm:$0xf]
    %v2822 = vld [vmem:[%s14 + $0x4] sm:$0xf]
    %v2823 = vld [vmem:[%s14 + $0x8] sm:$0xf]
    %v2824 = vld [vmem:[%s14 + $0xc] sm:$0xf]
    %v2825 = vld [vmem:[%s14 + $0x10] sm:$0xf]
    %v2826 = vld [vmem:[%s14 + $0x14] sm:$0xf]
    %v2827 = vld [vmem:[%s14 + $0x18] sm:$0xf]
    %v2828 = vld [vmem:[%s14 + $0x1c] sm:$0xf]
    %v2829 = vld [vmem:[%s14 + $0x20] sm:$0xf]
    %v2830 = vld [vmem:[%s14 + $0x24] sm:$0xf]
    %v2831 = vld [vmem:[%s14 + $0x28] sm:$0xf]
    %v2832 = vld [vmem:[%s14 + $0x2c] sm:$0xf]
    %v2833 = vld [vmem:[%s14 + $0x30] sm:$0xf]
    %v2834 = vld [vmem:[%s14 + $0x34] sm:$0xf]
    %v2835 = vld [vmem:[%s14 + $0x38] sm:$0xf]
    %v2836 = vld [vmem:[%s14 + $0x3c] sm:$0xf]
    %v2837 = vld [vmem:[%s14 + $0x40] sm:$0xf]
    %v2838 = vld [vmem:[%s14 + $0x44] sm:$0xf]
    %v2839 = vld [vmem:[%s14 + $0x48] sm:$0xf]
    %v2840 = vld [vmem:[%s14 + $0x4c] sm:$0xf]
    %v2841 = vld [vmem:[%s14 + $0x50] sm:$0xf]
    %v2842 = vld [vmem:[%s14 + $0x54] sm:$0xf]
    %v2843 = vld [vmem:[%s14 + $0x58] sm:$0xf]
    %v2844 = vld [vmem:[%s14 + $0x5c] sm:$0xf]
    %v2845 = vld [vmem:[%s14 + $0x60] sm:$0xf]
    %v2846 = vld [vmem:[%s14 + $0x64] sm:$0xf]
    %v2847 = vld [vmem:[%s14 + $0x68] sm:$0xf]
    %v2848 = vld [vmem:[%s14 + $0x6c] sm:$0xf]
    %v2849 = vld [vmem:[%s14 + $0x70] sm:$0xf]
    %v2850 = vld [vmem:[%s14 + $0x74] sm:$0xf]
    %v2851 = vld [vmem:[%s14 + $0x78] sm:$0xf]
    %v2852 = vld [vmem:[%s14 + $0x7c] sm:$0xf]
    %v2853 = vld [vmem:[%s15] sm:$0x1]
    %v2855 = vlaneseq
    %v2856 = vshrl.u32 %v2855, 7
    %v2857 = vsub.s32 0, %v2856
    %v2858 = vrot.slane %v2853, %v2857
    %v2892 = vunpack.c.l.b16 %v2821
    %v2893 = vunpack.c.l.b16 %v2822
    %v2894 = vunpack.c.l.b16 %v2823
    %v2895 = vunpack.c.l.b16 %v2824
    %v2896 = vunpack.c.l.b16 %v2825
    %v2897 = vunpack.c.l.b16 %v2826
    %v2898 = vunpack.c.l.b16 %v2827
    %v2899 = vunpack.c.l.b16 %v2828
    %v2900 = vunpack.c.l.b16 %v2829
    %v2901 = vunpack.c.l.b16 %v2830
    %v2902 = vunpack.c.l.b16 %v2831
    %v2903 = vunpack.c.l.b16 %v2832
    %v2904 = vunpack.c.l.b16 %v2833
    %v2905 = vunpack.c.l.b16 %v2834
    %v2906 = vunpack.c.l.b16 %v2835
    %v2907 = vunpack.c.l.b16 %v2836
    %v2908 = vunpack.c.l.b16 %v2837
    %v2909 = vunpack.c.l.b16 %v2838
    %v2910 = vunpack.c.l.b16 %v2839
    %v2911 = vunpack.c.l.b16 %v2840
    %v2912 = vunpack.c.l.b16 %v2841
    %v2913 = vunpack.c.l.b16 %v2842
    %v2914 = vunpack.c.l.b16 %v2843
    %v2915 = vunpack.c.l.b16 %v2844
    %v2916 = vunpack.c.l.b16 %v2845
    %v2917 = vunpack.c.l.b16 %v2846
    %v2918 = vunpack.c.l.b16 %v2847
    %v2919 = vunpack.c.l.b16 %v2848
    %v2920 = vunpack.c.l.b16 %v2849
    %v2921 = vunpack.c.l.b16 %v2850
    %v2922 = vunpack.c.l.b16 %v2851
    %v2923 = vunpack.c.l.b16 %v2852
    %v2924 = vpack.c.b16 %v2893, %v2892
    %v2925 = vpack.c.b16 %v2895, %v2894
    %v2926 = vpack.c.b16 %v2897, %v2896
    %v2927 = vpack.c.b16 %v2899, %v2898
    %v2928 = vpack.c.b16 %v2901, %v2900
    %v2929 = vpack.c.b16 %v2903, %v2902
    %v2930 = vpack.c.b16 %v2905, %v2904
    %v2931 = vpack.c.b16 %v2907, %v2906
    %v2932 = vpack.c.b16 %v2909, %v2908
    %v2933 = vpack.c.b16 %v2911, %v2910
    %v2934 = vpack.c.b16 %v2913, %v2912
    %v2935 = vpack.c.b16 %v2915, %v2914
    %v2936 = vpack.c.b16 %v2917, %v2916
    %v2937 = vpack.c.b16 %v2919, %v2918
    %v2938 = vpack.c.b16 %v2921, %v2920
    %v2939 = vpack.c.b16 %v2923, %v2922
    %2956 = vmatprep.subr.bf16.mxu0 0
    %2957 = vmatpush1.bf16.msra.mxu0 %v2931
    %2958 = vmatprep.subr.bf16.mxu0 0
    %2959 = vmatpush1.bf16.msra.mxu0 %v2930
    %2960 = vmatprep.subr.bf16.mxu0 0
    %2961 = vmatpush1.bf16.msra.mxu0 %v2929
    %2962 = vmatprep.subr.bf16.mxu0 0
    %2963 = vmatpush1.bf16.msra.mxu0 %v2928
    %2964 = vmatprep.subr.bf16.mxu0 0
    %2965 = vmatpush1.bf16.msra.mxu0 %v2927
    %2966 = vmatprep.subr.bf16.mxu0 0
    %2967 = vmatpush1.bf16.msra.mxu0 %v2926
    %2968 = vmatprep.subr.bf16.mxu0 0
    %2969 = vmatpush1.bf16.msra.mxu0 %v2925
    %2970 = vmatprep.subr.bf16.mxu0 0
    %2971 = vmatpush1.bf16.msra.mxu0 %v2924
    %2972 = vmatprep.subr.bf16.mxu0 0
    %2973 = vmatpush2.bf16.msra.mxu0 %v2939
    %2974 = vmatprep.subr.bf16.mxu0 0
    %2975 = vmatpush2.bf16.msra.mxu0 %v2938
    %2976 = vmatprep.subr.bf16.mxu0 0
    %2977 = vmatpush2.bf16.msra.mxu0 %v2937
    %2978 = vmatprep.subr.bf16.mxu0 0
    %2979 = vmatpush2.bf16.msra.mxu0 %v2936
    %2980 = vmatprep.subr.bf16.mxu0 0
    %2981 = vmatpush2.bf16.msra.mxu0 %v2935
    %2982 = vmatprep.subr.bf16.mxu0 0
    %2983 = vmatpush2.bf16.msra.mxu0 %v2934
    %2984 = vmatprep.subr.bf16.mxu0 0
    %2985 = vmatpush2.bf16.msra.mxu0 %v2933
    %2986 = vmatprep.subr.bf16.mxu0 0
    %2987 = vmatpush2.bf16.msra.mxu0 %v2932
    %2988 = vmatprep.mubr.bf16.mxu0 %v2820
    %2989 = vmatmul.mubr.bf16.gmra.mxu0 %v2819
    %v2990 = vpop.f32.mrf.mxu0
    %v2991 = vadd.f32 %v2858, %v2990
    %v2992 = vpop.f32.mrf.mxu0
    %v2993 = vpop.f32.mrf.mxu0
    %v2994 = vpop.f32.mrf.mxu0
    %2995 = vdwg.mxu0
    %2996 = vst [vmem:[#allocation2] sm:$0x3] %v2991
    // Predicated region
    $region66: #{_lambda_.1} parent=1 // pred_check
      _
    $region67: #{_lambda_.1} parent=1 // pred_check_branch
      %2998 = sbr.rel (0) target = $region69
    $region68: #{_lambda_.1} parent=1 // pred_region
      %s3000 = ssub.s32 32, 32
      %3001 = vsyncadd [#allocation3], %s3000
      %s3003 = sshll.u32 [#allocation2], 4
      %s3004 = int_to_ptr.vmem [resolvable:$true] %s3003
      %3006 = dma.vmem_to_hbm [thread:$0]  %s3004, 32, %s16, [#allocation3]
    $region69: #{_lambda_.1} parent=1 // pred_fallthru
      _
    // Predicated region
    $region70: #{_lambda_.1} parent=1 // pred_check
      _
    $region71: #{_lambda_.1} parent=1 // pred_check_branch
      %3008 = sbr.rel (0) target = $region73
    $region72: #{_lambda_.1} parent=1 // pred_region
      %3009 = dma.done [#allocation3], 32
    $region73: #{_lambda_.1} parent=1 // pred_fallthru
      _
    %3010 = vsyncpa [#allocation3], 1

</llo_original>
